<compile_context>
chip_gen: v7x
topology: tpu7x:2x2x1
jax: 0.10.0
libtpu: 0.0.40
codegen_flags: <defaults>
</compile_context>

<pallas_src>
import jax
import jax.numpy as jnp
from jax import lax
from jax.experimental import pallas as pl
from jax.experimental.pallas import tpu as pltpu

LANE = 128       # lane width (last-dim alignment)
SUBLANE = 8      # f32 sublane count (second-to-last-dim alignment)
T_BLK_MAX = 32   # max timesteps per sequential grid step (amortizes ~600-cycle step overhead)


def _round_up(x, m):
    return ((x + m - 1) // m) * m


# ----------------------------------------------------------------------------
# Kernel 1: sequential 2-layer ReLU RNN over time (hoisted input projections)
# ----------------------------------------------------------------------------
def make_rnn_kernel(t_blk, b_pad):
    def rnn_recurrent_kernel(x_ref,        # (t_blk*b_pad, H) bf16, time-major flattened block
                             wih0_ref,     # (H, H) bf16  Wih0^T
                             whh0_ref,     # (H, H) bf16  Whh0^T
                             b0_ref,       # (1, H)  f32  bih0 + bhh0
                             wih1_ref, whh1_ref, b1_ref,
                             h_out_ref,    # (b_pad, t_blk, H) bf16, batch-first hidden states
                             h0_ref, h1_ref,   # (b_pad, H) f32 carries (persist across steps)
                             z_ref,            # (t_blk*b_pad, H) f32 hoisted input projection
                             hblk_ref):        # (t_blk*b_pad, H) f32 layer-0 outputs (block)
        # h_0 = zeros (nn.RNN default initial hidden state).
        @pl.when(pl.program_id(0) == 0)
        def _():
            h0_ref[...] = jnp.zeros_like(h0_ref)
            h1_ref[...] = jnp.zeros_like(h1_ref)

        # ---- layer 0: hoisted input projection: ONE (t_blk*b_pad, H) @ (H, H) MXU matmul ----
        z_ref[...] = jnp.dot(x_ref[...], wih0_ref[...],
                             preferred_element_type=jnp.float32)

        whh0 = whh0_ref[...]
        b0 = b0_ref[...]
        h = h0_ref[...]
        # Statically unrolled serial loop (t_blk <= 32): only h @ Whh^T on the critical path.
        for i in range(t_blk):
            r = i * b_pad
            h = jnp.maximum(
                z_ref[r:r + b_pad, :] + b0
                + jnp.dot(h.astype(jnp.bfloat16), whh0,
                          preferred_element_type=jnp.float32),
                0.0)
            hblk_ref[r:r + b_pad, :] = h
        h0_ref[...] = h

        # ---- layer 1 (inter-layer RNN dropout is identity in eval mode) ----
        # Hoisted input projection over the layer-0 block (one big matmul, off the serial path).
        z_ref[...] = jnp.dot(hblk_ref[...].astype(jnp.bfloat16), wih1_ref[...],
                             preferred_element_type=jnp.float32)

        whh1 = whh1_ref[...]
        b1 = b1_ref[...]
        h = h1_ref[...]
        for i in range(t_blk):
            r = i * b_pad
            h = jnp.maximum(
                z_ref[r:r + b_pad, :] + b1
                + jnp.dot(h.astype(jnp.bfloat16), whh1,
                          preferred_element_type=jnp.float32),
                0.0)
            # Write directly into the batch-first output block (static index store).
            h_out_ref[:, i, :] = h.astype(jnp.bfloat16)
        h1_ref[...] = h

    return rnn_recurrent_kernel


# ----------------------------------------------------------------------------
# Kernel 2: hoisted decoder -- one big (B*S, H) @ (H, V) matmul, parallel grid
# ----------------------------------------------------------------------------
def decoder_kernel(h_ref, w_ref, o_ref):
    # Linear(hidden -> vocab, bias=False); decoder dropout is identity in eval mode.
    o_ref[...] = jnp.dot(h_ref[...], w_ref[...], preferred_element_type=jnp.float32)


# ----------------------------------------------------------------------------
# Wrapper
# ----------------------------------------------------------------------------
def rnn_language_model_forward(kparams, input_ids, *, vocab_size):
    """input_ids (B, S) int32 -> logits (B, S, vocab_size) float32 (batch-first)."""
    B, S = input_ids.shape
    H_pad = kparams["wih0"].shape[1]
    V_pad = kparams["w_cls"].shape[1]

    B_pad = _round_up(max(B, 1), SUBLANE)
    T_BLK = _round_up(S, SUBLANE) if S <= T_BLK_MAX else T_BLK_MAX
    S_pad = _round_up(S, T_BLK)
    n_t = S_pad // T_BLK
    rows_blk = T_BLK * B_pad

    # Embedding lookup (dropout identity in eval). Pad the *ids* (tiny) instead of the
    # (S, B, H) embeds -> no extra full-tensor HBM pad copy. Padded positions are trailing
    # timesteps / batch rows, so they never influence the returned [:B, :S] slice.
    ids_pad = jnp.pad(input_ids, ((0, B_pad - B), (0, S_pad - S)))
    x = kparams["embedding"][ids_pad.T].reshape(S_pad * B_pad, H_pad)   # time-major, flat, bf16

    weight_spec = lambda shape: pl.BlockSpec(shape, lambda t: (0,) * len(shape))

    # 2 layers x (hoisted input proj + recurrent proj), each 2*M*H*H flops.
    flops_rnn = 2 * 4 * S_pad * B_pad * H_pad * H_pad
    bytes_rnn = (2 * S_pad * B_pad * H_pad) * 2 + 4 * H_pad * H_pad * 2 + 2 * H_pad * 4

    # NOTE: resident weights could additionally be single-buffered (pipeline_mode) on
    # VMEM-tight chips; here we keep the default and budget VMEM explicitly instead.
    hidden = pl.pallas_call(
        make_rnn_kernel(T_BLK, B_pad),
        out_shape=jax.ShapeDtypeStruct((B_pad, S_pad, H_pad), jnp.bfloat16),
        grid=(n_t,),
        in_specs=[
            pl.BlockSpec((rows_blk, H_pad), lambda t: (t, 0)),           # x: one time block
            weight_spec((H_pad, H_pad)), weight_spec((H_pad, H_pad)),    # layer-0 Wih^T, Whh^T
            weight_spec((1, H_pad)),                                     # layer-0 bias
            weight_spec((H_pad, H_pad)), weight_spec((H_pad, H_pad)),    # layer-1 Wih^T, Whh^T
            weight_spec((1, H_pad)),                                     # layer-1 bias
        ],
        out_specs=pl.BlockSpec((B_pad, T_BLK, H_pad), lambda t: (0, t, 0)),  # batch-first
        scratch_shapes=[
            pltpu.VMEM((B_pad, H_pad), jnp.float32),        # h carry, layer 0
            pltpu.VMEM((B_pad, H_pad), jnp.float32),        # h carry, layer 1
            pltpu.VMEM((rows_blk, H_pad), jnp.float32),     # hoisted input projection z
            pltpu.VMEM((rows_blk, H_pad), jnp.float32),     # layer-0 hidden block
        ],
        compiler_params=pltpu.CompilerParams(
            dimension_semantics=("arbitrary",),             # recurrence over time: sequential
            vmem_limit_bytes=48 * 1024 * 1024),             # headroom > v5e 16MiB default,
                                                            # within v7x 64MiB physical
        cost_estimate=pl.CostEstimate(
            flops=flops_rnn, transcendentals=0, bytes_accessed=bytes_rnn),
    )(x, kparams["wih0"], kparams["whh0"], kparams["b0"],
      kparams["wih1"], kparams["whh1"], kparams["b1"])

    # ---- decoder: consume padded batch-first hidden via a free reshape (no transpose/pad) ----
    M = B_pad * S_pad
    h_flat = hidden.reshape(M, H_pad)

    TM = next(c for c in (256, 128, 64) if M % c == 0)       # M is always a multiple of 64
    TN = next(c for c in (512, 256, 128) if V_pad % c == 0)  # V_pad is a multiple of 128
    flops_dec = 2 * M * H_pad * V_pad

    if V_pad >= M:
        # Classifier dominates: M innermost so each w_cls tile stays VMEM-resident.
        grid = (V_pad // TN, M // TM)
        h_spec = pl.BlockSpec((TM, H_pad), lambda j, i: (i, 0))
        w_spec = pl.BlockSpec((H_pad, TN), lambda j, i: (0, j))
        o_spec = pl.BlockSpec((TM, TN), lambda j, i: (i, j))
        bytes_dec = (V_pad // TN) * M * H_pad * 2 + H_pad * V_pad * 2 + M * V_pad * 4
    else:
        grid = (M // TM, V_pad // TN)
        h_spec = pl.BlockSpec((TM, H_pad), lambda i, j: (i, 0))
        w_spec = pl.BlockSpec((H_pad, TN), lambda i, j: (0, j))
        o_spec = pl.BlockSpec((TM, TN), lambda i, j: (i, j))
        bytes_dec = (M // TM) * H_pad * V_pad * 2 + M * H_pad * 2 + M * V_pad * 4

    logits_flat = pl.pallas_call(
        decoder_kernel,
        out_shape=jax.ShapeDtypeStruct((M, V_pad), jnp.float32),
        grid=grid,
        in_specs=[h_spec, w_spec],
        out_specs=o_spec,
        compiler_params=pltpu.CompilerParams(
            dimension_semantics=("parallel", "parallel")),
        cost_estimate=pl.CostEstimate(
            flops=flops_dec, transcendentals=0, bytes_accessed=bytes_dec),
    )(h_flat, kparams["w_cls"])

    # Static slice (B, S, vocab_size are compile-time constants).
    return logits_flat.reshape(B_pad, S_pad, V_pad)[:B, :S, :vocab_size]


# ----------------------------------------------------------------------------
# Parameters
# ----------------------------------------------------------------------------
def init_params(key, vocab_size, hidden_size):
    """Logical parameters with the same shapes/roles as the PyTorch module."""
    ks = jax.random.split(key, 10)
    bound = 1.0 / jnp.sqrt(hidden_size)

    emb = jax.random.normal(ks[0], (vocab_size, hidden_size), jnp.float32)
    emb = emb.at[0].set(0.0)   # nn.Embedding(..., padding_idx=0)

    def u(k, shape):
        return jax.random.uniform(k, shape, jnp.float32, -bound, bound)

    return {
        "embedding": emb,
        "wih0": u(ks[1], (hidden_size, hidden_size)),
        "whh0": u(ks[2], (hidden_size, hidden_size)),
        "bih0": u(ks[3], (hidden_size,)),
        "bhh0": u(ks[4], (hidden_size,)),
        "wih1": u(ks[5], (hidden_size, hidden_size)),
        "whh1": u(ks[6], (hidden_size, hidden_size)),
        "bih1": u(ks[7], (hidden_size,)),
        "bhh1": u(ks[8], (hidden_size,)),
        "w_cls": u(ks[9], (vocab_size, hidden_size)),   # nn.Linear(H, V, bias=False).weight
    }


def prepare_kernel_params(params):
    """Pad to MXU/vreg-friendly shapes, transpose weights, cast matmul operands to bf16."""
    V, H = params["embedding"].shape
    H_pad = _round_up(H, LANE)
    V_pad = _round_up(V, LANE)

    def pad2(a, rows, cols):
        return jnp.pad(a, ((0, rows - a.shape[0]), (0, cols - a.shape[1])))

    def wT(w):   # (H, H) -> padded transpose in bf16 (right operand of x @ W^T)
        return pad2(w.T, H_pad, H_pad).astype(jnp.bfloat16)

    def bias(bih, bhh):
        return pad2((bih + bhh).reshape(1, H), 1, H_pad)   # (1, H_pad) f32

    return {
        "embedding": pad2(params["embedding"], V, H_pad).astype(jnp.bfloat16),
        "wih0": wT(params["wih0"]), "whh0": wT(params["whh0"]),
        "b0": bias(params["bih0"], params["bhh0"]),
        "wih1": wT(params["wih1"]), "whh1": wT(params["whh1"]),
        "b1": bias(params["bih1"], params["bhh1"]),
        "w_cls": pad2(params["w_cls"].T, H_pad, V_pad).astype(jnp.bfloat16),
    }


# ----------------------------------------------------------------------------
# Pure-JAX reference (eval-mode forward; bf16 matmul operands / f32 accumulation
# to mirror the kernel's MXU precision)
# ----------------------------------------------------------------------------
def reference_forward(params, input_ids):
    bf = lambda a: a.astype(jnp.bfloat16)
    x = params["embedding"][input_ids]                 # (B, S, H) f32
    B, S, H = x.shape

    def run_layer(x_seq, wih, whh, bih, bhh):
        wih_t, whh_t = bf(wih.T), bf(whh.T)
        b = (bih + bhh)[None, :]

        def step(h, xt):
            h_new = jnp.maximum(
                jnp.dot(bf(xt), wih_t, preferred_element_type=jnp.float32)
                + jnp.dot(bf(h), whh_t, preferred_element_type=jnp.float32)
                + b, 0.0)
            return h_new, h_new

        _, ys = lax.scan(step, jnp.zeros((B, H), jnp.float32),
                         jnp.transpose(x_seq, (1, 0, 2)))
        return jnp.transpose(ys, (1, 0, 2))

    h = run_layer(x, params["wih0"], params["whh0"], params["bih0"], params["bhh0"])
    h = run_layer(h, params["wih1"], params["whh1"], params["bih1"], params["bhh1"])
    return jnp.dot(bf(h), bf(params["w_cls"].T), preferred_element_type=jnp.float32)


if __name__ == "__main__":
    VOCAB = 128
    HIDDEN = 32
    B, S = 2, 8

    key = jax.random.PRNGKey(0)
    k_params, k_ids = jax.random.split(key)

    params = init_params(k_params, VOCAB, HIDDEN)
    kparams = prepare_kernel_params(params)
    input_ids = jax.random.randint(k_ids, (B, S), 0, VOCAB, dtype=jnp.int32)

    fwd = jax.jit(rnn_language_model_forward, static_argnames=("vocab_size",))
    logits = jax.block_until_ready(fwd(kparams, input_ids, vocab_size=VOCAB))
    assert logits.shape == (B, S, VOCAB)

    ref = jax.block_until_ready(reference_forward(params, input_ids))
    max_err = jnp.max(jnp.abs(logits - ref))
    assert jnp.allclose(logits, ref, atol=2e-3, rtol=2e-3), (
        f"mismatch vs reference: max abs err {max_err}")

    # TODO(synk): RPC / multi-device placement (EmbeddingTable & Decoder agents) and the
    # CPU<->GPU tensor moves are distributed plumbing with no single-kernel equivalent;
    # dropout layers are identity in eval-mode forward.
    print("KERNEL_OK")
</pallas_src>

<mosaic_0001>
module attributes {stable_mosaic.version = 11 : i64} {
  func.func @decoder_kernel(%arg0: i32, %arg1: i32, %arg2: memref<64x128xbf16, #tpu.memory_space<vmem>>, %arg3: memref<128x128xbf16, #tpu.memory_space<vmem>>, %arg4: memref<64x128xf32, #tpu.memory_space<vmem>>) attributes {dimension_semantics = [#tpu.dimension_semantics<parallel>, #tpu.dimension_semantics<parallel>], iteration_bounds = array<i64: 1, 1>, scalar_prefetch = 0 : i64, scratch_operands = 0 : i64, tpu.core_type = #tpu.core_type<tc>, window_params = [{transform_indices = @transform_0, window_bounds = array<i64: 64, 128>}, {transform_indices = @transform_1, window_bounds = array<i64: 128, 128>}, {transform_indices = @transform_2, window_bounds = array<i64: 64, 128>}]} {
    %c0 = arith.constant 0 : index
    %c0_0 = arith.constant 0 : index
    %0 = vector.load %arg2[%c0, %c0_0] : memref<64x128xbf16, #tpu.memory_space<vmem>>, vector<64x128xbf16>
    %c0_1 = arith.constant 0 : index
    %c0_2 = arith.constant 0 : index
    %1 = vector.load %arg3[%c0_1, %c0_2] : memref<128x128xbf16, #tpu.memory_space<vmem>>, vector<128x128xbf16>
    %cst = arith.constant dense<0.000000e+00> : vector<64x128xf32>
    %2 = tpu.matmul %0, %1, %cst {dimension_numbers = #tpu.dot_dimension_numbers<[1], [0], [0], [1], [0, 0, 1, 1], [], []>} : vector<64x128xbf16>, vector<128x128xbf16>, vector<64x128xf32> -> vector<64x128xf32>
    %c0_3 = arith.constant 0 : index
    %c0_4 = arith.constant 0 : index
    %3 = vector.load %arg4[%c0_3, %c0_4] : memref<64x128xf32, #tpu.memory_space<vmem>>, vector<64x128xf32>
    tpu.vector_store %arg4[%c0_3, %c0_4], %2 {strides = array<i32>} : memref<64x128xf32, #tpu.memory_space<vmem>>, vector<64x128xf32>,
    return
  }
  func.func @transform_0(%arg0: i32, %arg1: i32) -> (i32, i32) {
    %c0_i32 = arith.constant 0 : i32
    %c0_i32_0 = arith.constant 0 : i32
    return %arg1, %c0_i32 : i32, i32
  }
  func.func @transform_1(%arg0: i32, %arg1: i32) -> (i32, i32) {
    %c0_i32 = arith.constant 0 : i32
    %c0_i32_0 = arith.constant 0 : i32
    return %c0_i32, %arg0 : i32, i32
  }
  func.func @transform_2(%arg0: i32, %arg1: i32) -> (i32, i32) {
    %c0_i32 = arith.constant 0 : i32
    return %arg1, %arg0 : i32, i32
  }
}

module attributes {stable_mosaic.version = 11 : i64} {
  func.func @rnn_recurrent_kernel(%arg0: i32, %arg1: memref<64x128xbf16, #tpu.memory_space<vmem>>, %arg2: memref<128x128xbf16, #tpu.memory_space<vmem>>, %arg3: memref<128x128xbf16, #tpu.memory_space<vmem>>, %arg4: memref<1x128xf32, #tpu.memory_space<vmem>>, %arg5: memref<128x128xbf16, #tpu.memory_space<vmem>>, %arg6: memref<128x128xbf16, #tpu.memory_space<vmem>>, %arg7: memref<1x128xf32, #tpu.memory_space<vmem>>, %arg8: memref<8x8x128xbf16, #tpu.memory_space<vmem>>, %arg9: memref<8x128xf32, #tpu.memory_space<vmem>>, %arg10: memref<8x128xf32, #tpu.memory_space<vmem>>, %arg11: memref<64x128xf32, #tpu.memory_space<vmem>>, %arg12: memref<64x128xf32, #tpu.memory_space<vmem>>) attributes {dimension_semantics = [#tpu.dimension_semantics<arbitrary>], iteration_bounds = array<i64: 1>, scalar_prefetch = 0 : i64, scratch_operands = 4 : i64, tpu.core_type = #tpu.core_type<tc>, window_params = [{transform_indices = @transform_0, window_bounds = array<i64: 64, 128>}, {pipeline_mode = #tpu.pipeline_mode<synchronous>, transform_indices = @transform_1, window_bounds = array<i64: 128, 128>}, {pipeline_mode = #tpu.pipeline_mode<synchronous>, transform_indices = @transform_2, window_bounds = array<i64: 128, 128>}, {pipeline_mode = #tpu.pipeline_mode<synchronous>, transform_indices = @transform_3, window_bounds = array<i64: 1, 128>}, {pipeline_mode = #tpu.pipeline_mode<synchronous>, transform_indices = @transform_4, window_bounds = array<i64: 128, 128>}, {pipeline_mode = #tpu.pipeline_mode<synchronous>, transform_indices = @transform_5, window_bounds = array<i64: 128, 128>}, {pipeline_mode = #tpu.pipeline_mode<synchronous>, transform_indices = @transform_6, window_bounds = array<i64: 1, 128>}, {transform_indices = @transform_7, window_bounds = array<i64: 8, 8, 128>}]} {
    %c0_i32 = arith.constant 0 : i32
    %0 = arith.cmpi eq, %arg0, %c0_i32 : i32
    %1 = arith.extui %0 : i1 to i32
    %c0_i32_0 = arith.constant 0 : i32
    %2 = arith.cmpi ne, %1, %c0_i32_0 : i32
    scf.if %2 {
      %cst_119 = arith.constant 0.000000e+00 : f32
      %188 = vector.broadcast %cst_119 : f32 to vector<8x128xf32>
      %c0_120 = arith.constant 0 : index
      %c0_121 = arith.constant 0 : index
      %189 = vector.load %arg9[%c0_120, %c0_121] : memref<8x128xf32, #tpu.memory_space<vmem>>, vector<8x128xf32>
      tpu.vector_store %arg9[%c0_120, %c0_121], %188 {strides = array<i32>} : memref<8x128xf32, #tpu.memory_space<vmem>>, vector<8x128xf32>,
      %cst_122 = arith.constant 0.000000e+00 : f32
      %190 = vector.broadcast %cst_122 : f32 to vector<8x128xf32>
      %c0_123 = arith.constant 0 : index
      %c0_124 = arith.constant 0 : index
      %191 = vector.load %arg10[%c0_123, %c0_124] : memref<8x128xf32, #tpu.memory_space<vmem>>, vector<8x128xf32>
      tpu.vector_store %arg10[%c0_123, %c0_124], %190 {strides = array<i32>} : memref<8x128xf32, #tpu.memory_space<vmem>>, vector<8x128xf32>,
    } else {
    }
    %c0 = arith.constant 0 : index
    %c0_1 = arith.constant 0 : index
    %3 = vector.load %arg1[%c0, %c0_1] : memref<64x128xbf16, #tpu.memory_space<vmem>>, vector<64x128xbf16>
    %c0_2 = arith.constant 0 : index
    %c0_3 = arith.constant 0 : index
    %4 = vector.load %arg2[%c0_2, %c0_3] : memref<128x128xbf16, #tpu.memory_space<vmem>>, vector<128x128xbf16>
    %cst = arith.constant dense<0.000000e+00> : vector<64x128xf32>
    %5 = tpu.matmul %3, %4, %cst {dimension_numbers = #tpu.dot_dimension_numbers<[1], [0], [0], [1], [0, 0, 1, 1], [], []>} : vector<64x128xbf16>, vector<128x128xbf16>, vector<64x128xf32> -> vector<64x128xf32>
    %c0_4 = arith.constant 0 : index
    %c0_5 = arith.constant 0 : index
    %6 = vector.load %arg11[%c0_4, %c0_5] : memref<64x128xf32, #tpu.memory_space<vmem>>, vector<64x128xf32>
    tpu.vector_store %arg11[%c0_4, %c0_5], %5 {strides = array<i32>} : memref<64x128xf32, #tpu.memory_space<vmem>>, vector<64x128xf32>,
    %c0_6 = arith.constant 0 : index
    %c0_7 = arith.constant 0 : index
    %7 = vector.load %arg3[%c0_6, %c0_7] : memref<128x128xbf16, #tpu.memory_space<vmem>>, vector<128x128xbf16>
    %c0_8 = arith.constant 0 : index
    %c0_9 = arith.constant 0 : index
    %8 = vector.load %arg4[%c0_8, %c0_9] : memref<1x128xf32, #tpu.memory_space<vmem>>, vector<1x128xf32>
    %c0_10 = arith.constant 0 : index
    %c0_11 = arith.constant 0 : index
    %9 = vector.load %arg9[%c0_10, %c0_11] : memref<8x128xf32, #tpu.memory_space<vmem>>, vector<8x128xf32>
    %c0_12 = arith.constant 0 : index
    %c0_13 = arith.constant 0 : index
    %10 = vector.load %arg11[%c0_12, %c0_13] : memref<64x128xf32, #tpu.memory_space<vmem>>, vector<8x128xf32>
    %11 = vector.broadcast %8 : vector<1x128xf32> to vector<8x128xf32>
    %12 = arith.addf %10, %11 : vector<8x128xf32>
    %13 = arith.truncf %9 : vector<8x128xf32> to vector<8x128xbf16>
    %cst_14 = arith.constant dense<0.000000e+00> : vector<8x128xf32>
    %14 = tpu.matmul %13, %7, %cst_14 {dimension_numbers = #tpu.dot_dimension_numbers<[1], [0], [0], [1], [0, 0, 1, 1], [], []>} : vector<8x128xbf16>, vector<128x128xbf16>, vector<8x128xf32> -> vector<8x128xf32>
    %15 = arith.addf %12, %14 : vector<8x128xf32>
    %cst_15 = arith.constant 0.000000e+00 : f32
    %16 = vector.broadcast %cst_15 : f32 to vector<8x128xf32>
    %17 = arith.maximumf %15, %16 : vector<8x128xf32>
    %c0_16 = arith.constant 0 : index
    %c0_17 = arith.constant 0 : index
    %18 = vector.load %arg12[%c0_16, %c0_17] : memref<64x128xf32, #tpu.memory_space<vmem>>, vector<8x128xf32>
    tpu.vector_store %arg12[%c0_16, %c0_17], %17 {strides = array<i32>} : memref<64x128xf32, #tpu.memory_space<vmem>>, vector<8x128xf32>,
    %c8 = arith.constant 8 : index
    %c0_18 = arith.constant 0 : index
    %19 = vector.load %arg11[%c8, %c0_18] : memref<64x128xf32, #tpu.memory_space<vmem>>, vector<8x128xf32>
    %20 = vector.broadcast %8 : vector<1x128xf32> to vector<8x128xf32>
    %21 = arith.addf %19, %20 : vector<8x128xf32>
    %22 = arith.truncf %17 : vector<8x128xf32> to vector<8x128xbf16>
    %cst_19 = arith.constant dense<0.000000e+00> : vector<8x128xf32>
    %23 = tpu.matmul %22, %7, %cst_19 {dimension_numbers = #tpu.dot_dimension_numbers<[1], [0], [0], [1], [0, 0, 1, 1], [], []>} : vector<8x128xbf16>, vector<128x128xbf16>, vector<8x128xf32> -> vector<8x128xf32>
    %24 = arith.addf %21, %23 : vector<8x128xf32>
    %cst_20 = arith.constant 0.000000e+00 : f32
    %25 = vector.broadcast %cst_20 : f32 to vector<8x128xf32>
    %26 = arith.maximumf %24, %25 : vector<8x128xf32>
    %c8_21 = arith.constant 8 : index
    %c0_22 = arith.constant 0 : index
    %27 = vector.load %arg12[%c8_21, %c0_22] : memref<64x128xf32, #tpu.memory_space<vmem>>, vector<8x128xf32>
    tpu.vector_store %arg12[%c8_21, %c0_22], %26 {strides = array<i32>} : memref<64x128xf32, #tpu.memory_space<vmem>>, vector<8x128xf32>,
    %c16 = arith.constant 16 : index
    %c0_23 = arith.constant 0 : index
    %28 = vector.load %arg11[%c16, %c0_23] : memref<64x128xf32, #tpu.memory_space<vmem>>, vector<8x128xf32>
    %29 = vector.broadcast %8 : vector<1x128xf32> to vector<8x128xf32>
    %30 = arith.addf %28, %29 : vector<8x128xf32>
    %31 = arith.truncf %26 : vector<8x128xf32> to vector<8x128xbf16>
    %cst_24 = arith.constant dense<0.000000e+00> : vector<8x128xf32>
    %32 = tpu.matmul %31, %7, %cst_24 {dimension_numbers = #tpu.dot_dimension_numbers<[1], [0], [0], [1], [0, 0, 1, 1], [], []>} : vector<8x128xbf16>, vector<128x128xbf16>, vector<8x128xf32> -> vector<8x128xf32>
    %33 = arith.addf %30, %32 : vector<8x128xf32>
    %cst_25 = arith.constant 0.000000e+00 : f32
    %34 = vector.broadcast %cst_25 : f32 to vector<8x128xf32>
    %35 = arith.maximumf %33, %34 : vector<8x128xf32>
    %c16_26 = arith.constant 16 : index
    %c0_27 = arith.constant 0 : index
    %36 = vector.load %arg12[%c16_26, %c0_27] : memref<64x128xf32, #tpu.memory_space<vmem>>, vector<8x128xf32>
    tpu.vector_store %arg12[%c16_26, %c0_27], %35 {strides = array<i32>} : memref<64x128xf32, #tpu.memory_space<vmem>>, vector<8x128xf32>,
    %c24 = arith.constant 24 : index
    %c0_28 = arith.constant 0 : index
    %37 = vector.load %arg11[%c24, %c0_28] : memref<64x128xf32, #tpu.memory_space<vmem>>, vector<8x128xf32>
    %38 = vector.broadcast %8 : vector<1x128xf32> to vector<8x128xf32>
    %39 = arith.addf %37, %38 : vector<8x128xf32>
    %40 = arith.truncf %35 : vector<8x128xf32> to vector<8x128xbf16>
    %cst_29 = arith.constant dense<0.000000e+00> : vector<8x128xf32>
    %41 = tpu.matmul %40, %7, %cst_29 {dimension_numbers = #tpu.dot_dimension_numbers<[1], [0], [0], [1], [0, 0, 1, 1], [], []>} : vector<8x128xbf16>, vector<128x128xbf16>, vector<8x128xf32> -> vector<8x128xf32>
    %42 = arith.addf %39, %41 : vector<8x128xf32>
    %cst_30 = arith.constant 0.000000e+00 : f32
    %43 = vector.broadcast %cst_30 : f32 to vector<8x128xf32>
    %44 = arith.maximumf %42, %43 : vector<8x128xf32>
    %c24_31 = arith.constant 24 : index
    %c0_32 = arith.constant 0 : index
    %45 = vector.load %arg12[%c24_31, %c0_32] : memref<64x128xf32, #tpu.memory_space<vmem>>, vector<8x128xf32>
    tpu.vector_store %arg12[%c24_31, %c0_32], %44 {strides = array<i32>} : memref<64x128xf32, #tpu.memory_space<vmem>>, vector<8x128xf32>,
    %c32 = arith.constant 32 : index
    %c0_33 = arith.constant 0 : index
    %46 = vector.load %arg11[%c32, %c0_33] : memref<64x128xf32, #tpu.memory_space<vmem>>, vector<8x128xf32>
    %47 = vector.broadcast %8 : vector<1x128xf32> to vector<8x128xf32>
    %48 = arith.addf %46, %47 : vector<8x128xf32>
    %49 = arith.truncf %44 : vector<8x128xf32> to vector<8x128xbf16>
    %cst_34 = arith.constant dense<0.000000e+00> : vector<8x128xf32>
    %50 = tpu.matmul %49, %7, %cst_34 {dimension_numbers = #tpu.dot_dimension_numbers<[1], [0], [0], [1], [0, 0, 1, 1], [], []>} : vector<8x128xbf16>, vector<128x128xbf16>, vector<8x128xf32> -> vector<8x128xf32>
    %51 = arith.addf %48, %50 : vector<8x128xf32>
    %cst_35 = arith.constant 0.000000e+00 : f32
    %52 = vector.broadcast %cst_35 : f32 to vector<8x128xf32>
    %53 = arith.maximumf %51, %52 : vector<8x128xf32>
    %c32_36 = arith.constant 32 : index
    %c0_37 = arith.constant 0 : index
    %54 = vector.load %arg12[%c32_36, %c0_37] : memref<64x128xf32, #tpu.memory_space<vmem>>, vector<8x128xf32>
    tpu.vector_store %arg12[%c32_36, %c0_37], %53 {strides = array<i32>} : memref<64x128xf32, #tpu.memory_space<vmem>>, vector<8x128xf32>,
    %c40 = arith.constant 40 : index
    %c0_38 = arith.constant 0 : index
    %55 = vector.load %arg11[%c40, %c0_38] : memref<64x128xf32, #tpu.memory_space<vmem>>, vector<8x128xf32>
    %56 = vector.broadcast %8 : vector<1x128xf32> to vector<8x128xf32>
    %57 = arith.addf %55, %56 : vector<8x128xf32>
    %58 = arith.truncf %53 : vector<8x128xf32> to vector<8x128xbf16>
    %cst_39 = arith.constant dense<0.000000e+00> : vector<8x128xf32>
    %59 = tpu.matmul %58, %7, %cst_39 {dimension_numbers = #tpu.dot_dimension_numbers<[1], [0], [0], [1], [0, 0, 1, 1], [], []>} : vector<8x128xbf16>, vector<128x128xbf16>, vector<8x128xf32> -> vector<8x128xf32>
    %60 = arith.addf %57, %59 : vector<8x128xf32>
    %cst_40 = arith.constant 0.000000e+00 : f32
    %61 = vector.broadcast %cst_40 : f32 to vector<8x128xf32>
    %62 = arith.maximumf %60, %61 : vector<8x128xf32>
    %c40_41 = arith.constant 40 : index
    %c0_42 = arith.constant 0 : index
    %63 = vector.load %arg12[%c40_41, %c0_42] : memref<64x128xf32, #tpu.memory_space<vmem>>, vector<8x128xf32>
    tpu.vector_store %arg12[%c40_41, %c0_42], %62 {strides = array<i32>} : memref<64x128xf32, #tpu.memory_space<vmem>>, vector<8x128xf32>,
    %c48 = arith.constant 48 : index
    %c0_43 = arith.constant 0 : index
    %64 = vector.load %arg11[%c48, %c0_43] : memref<64x128xf32, #tpu.memory_space<vmem>>, vector<8x128xf32>
    %65 = vector.broadcast %8 : vector<1x128xf32> to vector<8x128xf32>
    %66 = arith.addf %64, %65 : vector<8x128xf32>
    %67 = arith.truncf %62 : vector<8x128xf32> to vector<8x128xbf16>
    %cst_44 = arith.constant dense<0.000000e+00> : vector<8x128xf32>
    %68 = tpu.matmul %67, %7, %cst_44 {dimension_numbers = #tpu.dot_dimension_numbers<[1], [0], [0], [1], [0, 0, 1, 1], [], []>} : vector<8x128xbf16>, vector<128x128xbf16>, vector<8x128xf32> -> vector<8x128xf32>
    %69 = arith.addf %66, %68 : vector<8x128xf32>
    %cst_45 = arith.constant 0.000000e+00 : f32
    %70 = vector.broadcast %cst_45 : f32 to vector<8x128xf32>
    %71 = arith.maximumf %69, %70 : vector<8x128xf32>
    %c48_46 = arith.constant 48 : index
    %c0_47 = arith.constant 0 : index
    %72 = vector.load %arg12[%c48_46, %c0_47] : memref<64x128xf32, #tpu.memory_space<vmem>>, vector<8x128xf32>
    tpu.vector_store %arg12[%c48_46, %c0_47], %71 {strides = array<i32>} : memref<64x128xf32, #tpu.memory_space<vmem>>, vector<8x128xf32>,
    %c56 = arith.constant 56 : index
    %c0_48 = arith.constant 0 : index
    %73 = vector.load %arg11[%c56, %c0_48] : memref<64x128xf32, #tpu.memory_space<vmem>>, vector<8x128xf32>
    %74 = vector.broadcast %8 : vector<1x128xf32> to vector<8x128xf32>
    %75 = arith.addf %73, %74 : vector<8x128xf32>
    %76 = arith.truncf %71 : vector<8x128xf32> to vector<8x128xbf16>
    %cst_49 = arith.constant dense<0.000000e+00> : vector<8x128xf32>
    %77 = tpu.matmul %76, %7, %cst_49 {dimension_numbers = #tpu.dot_dimension_numbers<[1], [0], [0], [1], [0, 0, 1, 1], [], []>} : vector<8x128xbf16>, vector<128x128xbf16>, vector<8x128xf32> -> vector<8x128xf32>
    %78 = arith.addf %75, %77 : vector<8x128xf32>
    %cst_50 = arith.constant 0.000000e+00 : f32
    %79 = vector.broadcast %cst_50 : f32 to vector<8x128xf32>
    %80 = arith.maximumf %78, %79 : vector<8x128xf32>
    %c56_51 = arith.constant 56 : index
    %c0_52 = arith.constant 0 : index
    %81 = vector.load %arg12[%c56_51, %c0_52] : memref<64x128xf32, #tpu.memory_space<vmem>>, vector<8x128xf32>
    tpu.vector_store %arg12[%c56_51, %c0_52], %80 {strides = array<i32>} : memref<64x128xf32, #tpu.memory_space<vmem>>, vector<8x128xf32>,
    %c0_53 = arith.constant 0 : index
    %c0_54 = arith.constant 0 : index
    %82 = vector.load %arg9[%c0_53, %c0_54] : memref<8x128xf32, #tpu.memory_space<vmem>>, vector<8x128xf32>
    tpu.vector_store %arg9[%c0_53, %c0_54], %80 {strides = array<i32>} : memref<8x128xf32, #tpu.memory_space<vmem>>, vector<8x128xf32>,
    %c0_55 = arith.constant 0 : index
    %c0_56 = arith.constant 0 : index
    %83 = vector.load %arg12[%c0_55, %c0_56] : memref<64x128xf32, #tpu.memory_space<vmem>>, vector<64x128xf32>
    %84 = arith.truncf %83 : vector<64x128xf32> to vector<64x128xbf16>
    %c0_57 = arith.constant 0 : index
    %c0_58 = arith.constant 0 : index
    %85 = vector.load %arg5[%c0_57, %c0_58] : memref<128x128xbf16, #tpu.memory_space<vmem>>, vector<128x128xbf16>
    %cst_59 = arith.constant dense<0.000000e+00> : vector<64x128xf32>
    %86 = tpu.matmul %84, %85, %cst_59 {dimension_numbers = #tpu.dot_dimension_numbers<[1], [0], [0], [1], [0, 0, 1, 1], [], []>} : vector<64x128xbf16>, vector<128x128xbf16>, vector<64x128xf32> -> vector<64x128xf32>
    %c0_60 = arith.constant 0 : index
    %c0_61 = arith.constant 0 : index
    %87 = vector.load %arg11[%c0_60, %c0_61] : memref<64x128xf32, #tpu.memory_space<vmem>>, vector<64x128xf32>
    tpu.vector_store %arg11[%c0_60, %c0_61], %86 {strides = array<i32>} : memref<64x128xf32, #tpu.memory_space<vmem>>, vector<64x128xf32>,
    %c0_62 = arith.constant 0 : index
    %c0_63 = arith.constant 0 : index
    %88 = vector.load %arg6[%c0_62, %c0_63] : memref<128x128xbf16, #tpu.memory_space<vmem>>, vector<128x128xbf16>
    %c0_64 = arith.constant 0 : index
    %c0_65 = arith.constant 0 : index
    %89 = vector.load %arg7[%c0_64, %c0_65] : memref<1x128xf32, #tpu.memory_space<vmem>>, vector<1x128xf32>
    %c0_66 = arith.constant 0 : index
    %c0_67 = arith.constant 0 : index
    %90 = vector.load %arg10[%c0_66, %c0_67] : memref<8x128xf32, #tpu.memory_space<vmem>>, vector<8x128xf32>
    %c0_68 = arith.constant 0 : index
    %c0_69 = arith.constant 0 : index
    %91 = vector.load %arg11[%c0_68, %c0_69] : memref<64x128xf32, #tpu.memory_space<vmem>>, vector<8x128xf32>
    %92 = vector.broadcast %89 : vector<1x128xf32> to vector<8x128xf32>
    %93 = arith.addf %91, %92 : vector<8x128xf32>
    %94 = arith.truncf %90 : vector<8x128xf32> to vector<8x128xbf16>
    %cst_70 = arith.constant dense<0.000000e+00> : vector<8x128xf32>
    %95 = tpu.matmul %94, %88, %cst_70 {dimension_numbers = #tpu.dot_dimension_numbers<[1], [0], [0], [1], [0, 0, 1, 1], [], []>} : vector<8x128xbf16>, vector<128x128xbf16>, vector<8x128xf32> -> vector<8x128xf32>
    %96 = arith.addf %93, %95 : vector<8x128xf32>
    %cst_71 = arith.constant 0.000000e+00 : f32
    %97 = vector.broadcast %cst_71 : f32 to vector<8x128xf32>
    %98 = arith.maximumf %96, %97 : vector<8x128xf32>
    %99 = arith.truncf %98 : vector<8x128xf32> to vector<8x128xbf16>
    %c0_72 = arith.constant 0 : index
    %c0_73 = arith.constant 0 : index
    %c0_74 = arith.constant 0 : index
    %100 = vector.load %arg8[%c0_72, %c0_73, %c0_74] : memref<8x8x128xbf16, #tpu.memory_space<vmem>>, vector<8x1x128xbf16>
    %101 = vector.shape_cast %100 : vector<8x1x128xbf16> to vector<8x128xbf16>
    %102 = vector.shape_cast %99 : vector<8x128xbf16> to vector<8x1x128xbf16>
    tpu.vector_store %arg8[%c0_72, %c0_73, %c0_74], %102 {strides = array<i32>} : memref<8x8x128xbf16, #tpu.memory_space<vmem>>, vector<8x1x128xbf16>,
    %c8_75 = arith.constant 8 : index
    %c0_76 = arith.constant 0 : index
    %103 = vector.load %arg11[%c8_75, %c0_76] : memref<64x128xf32, #tpu.memory_space<vmem>>, vector<8x128xf32>
    %104 = vector.broadcast %89 : vector<1x128xf32> to vector<8x128xf32>
    %105 = arith.addf %103, %104 : vector<8x128xf32>
    %106 = arith.truncf %98 : vector<8x128xf32> to vector<8x128xbf16>
    %cst_77 = arith.constant dense<0.000000e+00> : vector<8x128xf32>
    %107 = tpu.matmul %106, %88, %cst_77 {dimension_numbers = #tpu.dot_dimension_numbers<[1], [0], [0], [1], [0, 0, 1, 1], [], []>} : vector<8x128xbf16>, vector<128x128xbf16>, vector<8x128xf32> -> vector<8x128xf32>
    %108 = arith.addf %105, %107 : vector<8x128xf32>
    %cst_78 = arith.constant 0.000000e+00 : f32
    %109 = vector.broadcast %cst_78 : f32 to vector<8x128xf32>
    %110 = arith.maximumf %108, %109 : vector<8x128xf32>
    %111 = arith.truncf %110 : vector<8x128xf32> to vector<8x128xbf16>
    %c0_79 = arith.constant 0 : index
    %c1 = arith.constant 1 : index
    %c0_80 = arith.constant 0 : index
    %112 = vector.load %arg8[%c0_79, %c1, %c0_80] : memref<8x8x128xbf16, #tpu.memory_space<vmem>>, vector<8x1x128xbf16>
    %113 = vector.shape_cast %112 : vector<8x1x128xbf16> to vector<8x128xbf16>
    %114 = vector.shape_cast %111 : vector<8x128xbf16> to vector<8x1x128xbf16>
    tpu.vector_store %arg8[%c0_79, %c1, %c0_80], %114 {strides = array<i32>} : memref<8x8x128xbf16, #tpu.memory_space<vmem>>, vector<8x1x128xbf16>,
    %c16_81 = arith.constant 16 : index
    %c0_82 = arith.constant 0 : index
    %115 = vector.load %arg11[%c16_81, %c0_82] : memref<64x128xf32, #tpu.memory_space<vmem>>, vector<8x128xf32>
    %116 = vector.broadcast %89 : vector<1x128xf32> to vector<8x128xf32>
    %117 = arith.addf %115, %116 : vector<8x128xf32>
    %118 = arith.truncf %110 : vector<8x128xf32> to vector<8x128xbf16>
    %cst_83 = arith.constant dense<0.000000e+00> : vector<8x128xf32>
    %119 = tpu.matmul %118, %88, %cst_83 {dimension_numbers = #tpu.dot_dimension_numbers<[1], [0], [0], [1], [0, 0, 1, 1], [], []>} : vector<8x128xbf16>, vector<128x128xbf16>, vector<8x128xf32> -> vector<8x128xf32>
    %120 = arith.addf %117, %119 : vector<8x128xf32>
    %cst_84 = arith.constant 0.000000e+00 : f32
    %121 = vector.broadcast %cst_84 : f32 to vector<8x128xf32>
    %122 = arith.maximumf %120, %121 : vector<8x128xf32>
    %123 = arith.truncf %122 : vector<8x128xf32> to vector<8x128xbf16>
    %c0_85 = arith.constant 0 : index
    %c2 = arith.constant 2 : index
    %c0_86 = arith.constant 0 : index
    %124 = vector.load %arg8[%c0_85, %c2, %c0_86] : memref<8x8x128xbf16, #tpu.memory_space<vmem>>, vector<8x1x128xbf16>
    %125 = vector.shape_cast %124 : vector<8x1x128xbf16> to vector<8x128xbf16>
    %126 = vector.shape_cast %123 : vector<8x128xbf16> to vector<8x1x128xbf16>
    tpu.vector_store %arg8[%c0_85, %c2, %c0_86], %126 {strides = array<i32>} : memref<8x8x128xbf16, #tpu.memory_space<vmem>>, vector<8x1x128xbf16>,
    %c24_87 = arith.constant 24 : index
    %c0_88 = arith.constant 0 : index
    %127 = vector.load %arg11[%c24_87, %c0_88] : memref<64x128xf32, #tpu.memory_space<vmem>>, vector<8x128xf32>
    %128 = vector.broadcast %89 : vector<1x128xf32> to vector<8x128xf32>
    %129 = arith.addf %127, %128 : vector<8x128xf32>
    %130 = arith.truncf %122 : vector<8x128xf32> to vector<8x128xbf16>
    %cst_89 = arith.constant dense<0.000000e+00> : vector<8x128xf32>
    %131 = tpu.matmul %130, %88, %cst_89 {dimension_numbers = #tpu.dot_dimension_numbers<[1], [0], [0], [1], [0, 0, 1, 1], [], []>} : vector<8x128xbf16>, vector<128x128xbf16>, vector<8x128xf32> -> vector<8x128xf32>
    %132 = arith.addf %129, %131 : vector<8x128xf32>
    %cst_90 = arith.constant 0.000000e+00 : f32
    %133 = vector.broadcast %cst_90 : f32 to vector<8x128xf32>
    %134 = arith.maximumf %132, %133 : vector<8x128xf32>
    %135 = arith.truncf %134 : vector<8x128xf32> to vector<8x128xbf16>
    %c0_91 = arith.constant 0 : index
    %c3 = arith.constant 3 : index
    %c0_92 = arith.constant 0 : index
    %136 = vector.load %arg8[%c0_91, %c3, %c0_92] : memref<8x8x128xbf16, #tpu.memory_space<vmem>>, vector<8x1x128xbf16>
    %137 = vector.shape_cast %136 : vector<8x1x128xbf16> to vector<8x128xbf16>
    %138 = vector.shape_cast %135 : vector<8x128xbf16> to vector<8x1x128xbf16>
    tpu.vector_store %arg8[%c0_91, %c3, %c0_92], %138 {strides = array<i32>} : memref<8x8x128xbf16, #tpu.memory_space<vmem>>, vector<8x1x128xbf16>,
    %c32_93 = arith.constant 32 : index
    %c0_94 = arith.constant 0 : index
    %139 = vector.load %arg11[%c32_93, %c0_94] : memref<64x128xf32, #tpu.memory_space<vmem>>, vector<8x128xf32>
    %140 = vector.broadcast %89 : vector<1x128xf32> to vector<8x128xf32>
    %141 = arith.addf %139, %140 : vector<8x128xf32>
    %142 = arith.truncf %134 : vector<8x128xf32> to vector<8x128xbf16>
    %cst_95 = arith.constant dense<0.000000e+00> : vector<8x128xf32>
    %143 = tpu.matmul %142, %88, %cst_95 {dimension_numbers = #tpu.dot_dimension_numbers<[1], [0], [0], [1], [0, 0, 1, 1], [], []>} : vector<8x128xbf16>, vector<128x128xbf16>, vector<8x128xf32> -> vector<8x128xf32>
    %144 = arith.addf %141, %143 : vector<8x128xf32>
    %cst_96 = arith.constant 0.000000e+00 : f32
    %145 = vector.broadcast %cst_96 : f32 to vector<8x128xf32>
    %146 = arith.maximumf %144, %145 : vector<8x128xf32>
    %147 = arith.truncf %146 : vector<8x128xf32> to vector<8x128xbf16>
    %c0_97 = arith.constant 0 : index
    %c4 = arith.constant 4 : index
    %c0_98 = arith.constant 0 : index
    %148 = vector.load %arg8[%c0_97, %c4, %c0_98] : memref<8x8x128xbf16, #tpu.memory_space<vmem>>, vector<8x1x128xbf16>
    %149 = vector.shape_cast %148 : vector<8x1x128xbf16> to vector<8x128xbf16>
    %150 = vector.shape_cast %147 : vector<8x128xbf16> to vector<8x1x128xbf16>
    tpu.vector_store %arg8[%c0_97, %c4, %c0_98], %150 {strides = array<i32>} : memref<8x8x128xbf16, #tpu.memory_space<vmem>>, vector<8x1x128xbf16>,
    %c40_99 = arith.constant 40 : index
    %c0_100 = arith.constant 0 : index
    %151 = vector.load %arg11[%c40_99, %c0_100] : memref<64x128xf32, #tpu.memory_space<vmem>>, vector<8x128xf32>
    %152 = vector.broadcast %89 : vector<1x128xf32> to vector<8x128xf32>
    %153 = arith.addf %151, %152 : vector<8x128xf32>
    %154 = arith.truncf %146 : vector<8x128xf32> to vector<8x128xbf16>
    %cst_101 = arith.constant dense<0.000000e+00> : vector<8x128xf32>
    %155 = tpu.matmul %154, %88, %cst_101 {dimension_numbers = #tpu.dot_dimension_numbers<[1], [0], [0], [1], [0, 0, 1, 1], [], []>} : vector<8x128xbf16>, vector<128x128xbf16>, vector<8x128xf32> -> vector<8x128xf32>
    %156 = arith.addf %153, %155 : vector<8x128xf32>
    %cst_102 = arith.constant 0.000000e+00 : f32
    %157 = vector.broadcast %cst_102 : f32 to vector<8x128xf32>
    %158 = arith.maximumf %156, %157 : vector<8x128xf32>
    %159 = arith.truncf %158 : vector<8x128xf32> to vector<8x128xbf16>
    %c0_103 = arith.constant 0 : index
    %c5 = arith.constant 5 : index
    %c0_104 = arith.constant 0 : index
    %160 = vector.load %arg8[%c0_103, %c5, %c0_104] : memref<8x8x128xbf16, #tpu.memory_space<vmem>>, vector<8x1x128xbf16>
    %161 = vector.shape_cast %160 : vector<8x1x128xbf16> to vector<8x128xbf16>
    %162 = vector.shape_cast %159 : vector<8x128xbf16> to vector<8x1x128xbf16>
    tpu.vector_store %arg8[%c0_103, %c5, %c0_104], %162 {strides = array<i32>} : memref<8x8x128xbf16, #tpu.memory_space<vmem>>, vector<8x1x128xbf16>,
    %c48_105 = arith.constant 48 : index
    %c0_106 = arith.constant 0 : index
    %163 = vector.load %arg11[%c48_105, %c0_106] : memref<64x128xf32, #tpu.memory_space<vmem>>, vector<8x128xf32>
    %164 = vector.broadcast %89 : vector<1x128xf32> to vector<8x128xf32>
    %165 = arith.addf %163, %164 : vector<8x128xf32>
    %166 = arith.truncf %158 : vector<8x128xf32> to vector<8x128xbf16>
    %cst_107 = arith.constant dense<0.000000e+00> : vector<8x128xf32>
    %167 = tpu.matmul %166, %88, %cst_107 {dimension_numbers = #tpu.dot_dimension_numbers<[1], [0], [0], [1], [0, 0, 1, 1], [], []>} : vector<8x128xbf16>, vector<128x128xbf16>, vector<8x128xf32> -> vector<8x128xf32>
    %168 = arith.addf %165, %167 : vector<8x128xf32>
    %cst_108 = arith.constant 0.000000e+00 : f32
    %169 = vector.broadcast %cst_108 : f32 to vector<8x128xf32>
    %170 = arith.maximumf %168, %169 : vector<8x128xf32>
    %171 = arith.truncf %170 : vector<8x128xf32> to vector<8x128xbf16>
    %c0_109 = arith.constant 0 : index
    %c6 = arith.constant 6 : index
    %c0_110 = arith.constant 0 : index
    %172 = vector.load %arg8[%c0_109, %c6, %c0_110] : memref<8x8x128xbf16, #tpu.memory_space<vmem>>, vector<8x1x128xbf16>
    %173 = vector.shape_cast %172 : vector<8x1x128xbf16> to vector<8x128xbf16>
    %174 = vector.shape_cast %171 : vector<8x128xbf16> to vector<8x1x128xbf16>
    tpu.vector_store %arg8[%c0_109, %c6, %c0_110], %174 {strides = array<i32>} : memref<8x8x128xbf16, #tpu.memory_space<vmem>>, vector<8x1x128xbf16>,
    %c56_111 = arith.constant 56 : index
    %c0_112 = arith.constant 0 : index
    %175 = vector.load %arg11[%c56_111, %c0_112] : memref<64x128xf32, #tpu.memory_space<vmem>>, vector<8x128xf32>
    %176 = vector.broadcast %89 : vector<1x128xf32> to vector<8x128xf32>
    %177 = arith.addf %175, %176 : vector<8x128xf32>
    %178 = arith.truncf %170 : vector<8x128xf32> to vector<8x128xbf16>
    %cst_113 = arith.constant dense<0.000000e+00> : vector<8x128xf32>
    %179 = tpu.matmul %178, %88, %cst_113 {dimension_numbers = #tpu.dot_dimension_numbers<[1], [0], [0], [1], [0, 0, 1, 1], [], []>} : vector<8x128xbf16>, vector<128x128xbf16>, vector<8x128xf32> -> vector<8x128xf32>
    %180 = arith.addf %177, %179 : vector<8x128xf32>
    %cst_114 = arith.constant 0.000000e+00 : f32
    %181 = vector.broadcast %cst_114 : f32 to vector<8x128xf32>
    %182 = arith.maximumf %180, %181 : vector<8x128xf32>
    %183 = arith.truncf %182 : vector<8x128xf32> to vector<8x128xbf16>
    %c0_115 = arith.constant 0 : index
    %c7 = arith.constant 7 : index
    %c0_116 = arith.constant 0 : index
    %184 = vector.load %arg8[%c0_115, %c7, %c0_116] : memref<8x8x128xbf16, #tpu.memory_space<vmem>>, vector<8x1x128xbf16>
    %185 = vector.shape_cast %184 : vector<8x1x128xbf16> to vector<8x128xbf16>
    %186 = vector.shape_cast %183 : vector<8x128xbf16> to vector<8x1x128xbf16>
    tpu.vector_store %arg8[%c0_115, %c7, %c0_116], %186 {strides = array<i32>} : memref<8x8x128xbf16, #tpu.memory_space<vmem>>, vector<8x1x128xbf16>,
    %c0_117 = arith.constant 0 : index
    %c0_118 = arith.constant 0 : index
    %187 = vector.load %arg10[%c0_117, %c0_118] : memref<8x128xf32, #tpu.memory_space<vmem>>, vector<8x128xf32>
    tpu.vector_store %arg10[%c0_117, %c0_118], %182 {strides = array<i32>} : memref<8x128xf32, #tpu.memory_space<vmem>>, vector<8x128xf32>,
    return
  }
  func.func @transform_0(%arg0: i32) -> (i32, i32) {
    %c0_i32 = arith.constant 0 : i32
    %c0_i32_0 = arith.constant 0 : i32
    return %arg0, %c0_i32 : i32, i32
  }
  func.func @transform_1(%arg0: i32) -> (i32, i32) {
    %c0_i32 = arith.constant 0 : i32
    %c0_i32_0 = arith.constant 0 : i32
    %c0_i32_1 = arith.constant 0 : i32
    return %c0_i32, %c0_i32_0 : i32, i32
  }
  func.func @transform_2(%arg0: i32) -> (i32, i32) {
    %c0_i32 = arith.constant 0 : i32
    %c0_i32_0 = arith.constant 0 : i32
    %c0_i32_1 = arith.constant 0 : i32
    return %c0_i32, %c0_i32_0 : i32, i32
  }
  func.func @transform_3(%arg0: i32) -> (i32, i32) {
    %c0_i32 = arith.constant 0 : i32
    %c0_i32_0 = arith.constant 0 : i32
    %c0_i32_1 = arith.constant 0 : i32
    return %c0_i32, %c0_i32_0 : i32, i32
  }
  func.func @transform_4(%arg0: i32) -> (i32, i32) {
    %c0_i32 = arith.constant 0 : i32
    %c0_i32_0 = arith.constant 0 : i32
    %c0_i32_1 = arith.constant 0 : i32
    return %c0_i32, %c0_i32_0 : i32, i32
  }
  func.func @transform_5(%arg0: i32) -> (i32, i32) {
    %c0_i32 = arith.constant 0 : i32
    %c0_i32_0 = arith.constant 0 : i32
    %c0_i32_1 = arith.constant 0 : i32
    return %c0_i32, %c0_i32_0 : i32, i32
  }
  func.func @transform_6(%arg0: i32) -> (i32, i32) {
    %c0_i32 = arith.constant 0 : i32
    %c0_i32_0 = arith.constant 0 : i32
    %c0_i32_1 = arith.constant 0 : i32
    return %c0_i32, %c0_i32_0 : i32, i32
  }
  func.func @transform_7(%arg0: i32) -> (i32, i32, i32) {
    %c0_i32 = arith.constant 0 : i32
    %c0_i32_0 = arith.constant 0 : i32
    %c0_i32_1 = arith.constant 0 : i32
    return %c0_i32, %arg0, %c0_i32_0 : i32, i32, i32
  }
}

</mosaic_0001>

<llo_original>
// kernel: rnn_language_model_forward.3
$region0: #{rnn_language_model_forward.3}
  #allocation0 [shape = 'u32[]', space=smem, size = 0x4, offset = 0x4, fixed_abs, tag = 'smem constant byte address 0x4 - core index']
  #allocation1 [shape = 'u32[144,128]{1,0:T(1,128)}', space=vmem, size = 0x12000, scoped, tag = 'internal scratch']
  %s0 = inlined_call_operand.vmem [shape: bf16[64,128], index: 0, kind: input, shape index: {}]
  %s1 = inlined_call_operand.vmem [shape: bf16[128,128], index: 1, kind: input, shape index: {}]
  %s2 = inlined_call_operand.vmem [shape: f32[64,128], index: 2, kind: output, shape index: {}]
  %s3 = sld [smem:[#allocation0]]
  $region18: #{rnn_language_model_forward.3} parent=0
    _
  %s5 = ssub.s32 1, %s3
  %s6 = scalar_select 0, %s5, %s3
  // Predicated region
  $region2: #{rnn_language_model_forward.3} parent=0 // pred_check
    _
  $region3: #{rnn_language_model_forward.3} parent=0 // pred_check_branch
    %8 = sbr.rel (0) target = $region5
  $region4: #{rnn_language_model_forward.3} parent=0 // pred_region
    _
  $region5: #{rnn_language_model_forward.3} parent=0 // pred_fallthru
    _
  // Predicated region
  $region6: #{rnn_language_model_forward.3} parent=0 // pred_check
    _
  $region7: #{rnn_language_model_forward.3} parent=0 // pred_check_branch
    %10 = sbr.rel (0) target = $region9
  $region8: #{rnn_language_model_forward.3} parent=0 // pred_region
    _
  $region9: #{rnn_language_model_forward.3} parent=0 // pred_fallthru
    _
  %v12 = vld [vmem:[%s0] sm:$0xf]
  %v13 = vld [vmem:[%s0 + $0x4] sm:$0xf]
  %v14 = vld [vmem:[%s0 + $0x8] sm:$0xf]
  %v15 = vld [vmem:[%s0 + $0xc] sm:$0xf]
  %v16 = vld [vmem:[%s0 + $0x10] sm:$0xf]
  %v17 = vld [vmem:[%s0 + $0x14] sm:$0xf]
  %v18 = vld [vmem:[%s0 + $0x18] sm:$0xf]
  %v19 = vld [vmem:[%s0 + $0x1c] sm:$0xf]
  %v20 = vld [vmem:[%s1] sm:$0xf]
  %v21 = vld [vmem:[%s1 + $0x4] sm:$0xf]
  %v22 = vld [vmem:[%s1 + $0x8] sm:$0xf]
  %v23 = vld [vmem:[%s1 + $0xc] sm:$0xf]
  %v24 = vld [vmem:[%s1 + $0x10] sm:$0xf]
  %v25 = vld [vmem:[%s1 + $0x14] sm:$0xf]
  %v26 = vld [vmem:[%s1 + $0x18] sm:$0xf]
  %v27 = vld [vmem:[%s1 + $0x1c] sm:$0xf]
  %v28 = vld [vmem:[%s1 + $0x20] sm:$0xf]
  %v29 = vld [vmem:[%s1 + $0x24] sm:$0xf]
  %v30 = vld [vmem:[%s1 + $0x28] sm:$0xf]
  %v31 = vld [vmem:[%s1 + $0x2c] sm:$0xf]
  %v32 = vld [vmem:[%s1 + $0x30] sm:$0xf]
  %v33 = vld [vmem:[%s1 + $0x34] sm:$0xf]
  %v34 = vld [vmem:[%s1 + $0x38] sm:$0xf]
  %v35 = vld [vmem:[%s1 + $0x3c] sm:$0xf]
  %v44 = vunpack.c.l.b16 %v12
  %v45 = vunpack.c.l.b16 %v13
  %v46 = vunpack.c.l.b16 %v14
  %v47 = vunpack.c.l.b16 %v15
  %v48 = vunpack.c.l.b16 %v16
  %v49 = vunpack.c.l.b16 %v17
  %v50 = vunpack.c.l.b16 %v18
  %v51 = vunpack.c.l.b16 %v19
  %v52 = vpack.c.b16 %v45, %v44
  %v53 = vpack.c.b16 %v47, %v46
  %v54 = vpack.c.b16 %v49, %v48
  %v55 = vpack.c.b16 %v51, %v50
  %v76 = vunpack.c.l.b16 %v20
  %v77 = vunpack.c.l.b16 %v21
  %v78 = vunpack.c.l.b16 %v22
  %v79 = vunpack.c.l.b16 %v23
  %v80 = vunpack.c.l.b16 %v24
  %v81 = vunpack.c.l.b16 %v25
  %v82 = vunpack.c.l.b16 %v26
  %v83 = vunpack.c.l.b16 %v27
  %v84 = vunpack.c.l.b16 %v28
  %v85 = vunpack.c.l.b16 %v29
  %v86 = vunpack.c.l.b16 %v30
  %v87 = vunpack.c.l.b16 %v31
  %v88 = vunpack.c.l.b16 %v32
  %v89 = vunpack.c.l.b16 %v33
  %v90 = vunpack.c.l.b16 %v34
  %v91 = vunpack.c.l.b16 %v35
  %v92 = vpack.c.b16 %v77, %v76
  %v93 = vpack.c.b16 %v79, %v78
  %v94 = vpack.c.b16 %v81, %v80
  %v95 = vpack.c.b16 %v83, %v82
  %v96 = vpack.c.b16 %v85, %v84
  %v97 = vpack.c.b16 %v87, %v86
  %v98 = vpack.c.b16 %v89, %v88
  %v99 = vpack.c.b16 %v91, %v90
  %108 = vmatprep.subr.bf16.mxu0 0
  %109 = vmatpush1.bf16.msra.mxu0 %v92
  %110 = vmatprep.subr.bf16.mxu0 0
  %111 = vmatpush1.bf16.msra.mxu0 %v93
  %112 = vmatprep.subr.bf16.mxu0 0
  %113 = vmatpush1.bf16.msra.mxu0 %v94
  %114 = vmatprep.subr.bf16.mxu0 0
  %115 = vmatpush1.bf16.msra.mxu0 %v95
  %116 = vmatprep.subr.bf16.mxu0 0
  %117 = vmatpush1.bf16.msra.mxu0 %v96
  %118 = vmatprep.subr.bf16.mxu0 0
  %119 = vmatpush1.bf16.msra.mxu0 %v97
  %120 = vmatprep.subr.bf16.mxu0 0
  %121 = vmatpush1.bf16.msra.mxu0 %v98
  %122 = vmatprep.subr.bf16.mxu0 0
  %123 = vmatpush1.bf16.msra.mxu0 %v99
  %124 = vmatprep.subr.bf16.mxu0 0
  %125 = vmatpush1.bf16.msra.mxu0 0
  %126 = vmatprep.subr.bf16.mxu0 0
  %127 = vmatpush1.bf16.msra.mxu0 0
  %128 = vmatprep.subr.bf16.mxu0 0
  %129 = vmatpush1.bf16.msra.mxu0 0
  %130 = vmatprep.subr.bf16.mxu0 0
  %131 = vmatpush1.bf16.msra.mxu0 0
  %132 = vmatprep.subr.bf16.mxu0 0
  %133 = vmatpush1.bf16.msra.mxu0 0
  %134 = vmatprep.subr.bf16.mxu0 0
  %135 = vmatpush1.bf16.msra.mxu0 0
  %136 = vmatprep.subr.bf16.mxu0 0
  %137 = vmatpush1.bf16.msra.mxu0 0
  %138 = vmatprep.subr.bf16.mxu0 0
  %139 = vmatpush1.bf16.msra.mxu0 0
  %140 = vmatprep.mubr.bf16.mxu0 0
  %141 = vmatmul.mubr.bf16.gmra.mrb[0].mxu0 %v52
  %v142 = vpop.f32.mrb[0].mxu0
  %v143 = vadd.f32 0.0, %v142
  %v144 = vpop.f32.mrb[0].mxu0
  %v145 = vpop.f32.mrb[0].mxu0
  %v146 = vadd.f32 0.0, %v145
  %v147 = vpop.f32.mrb[0].mxu0
  %148 = vmatprep.mubr.bf16.mxu0 0
  %149 = vmatmul.mubr.bf16.gmra.mrb[0].mxu0 %v53
  %v150 = vpop.f32.mrb[0].mxu0
  %v151 = vadd.f32 0.0, %v150
  %v152 = vpop.f32.mrb[0].mxu0
  %v153 = vpop.f32.mrb[0].mxu0
  %v154 = vadd.f32 0.0, %v153
  %v155 = vpop.f32.mrb[0].mxu0
  %156 = vmatprep.mubr.bf16.mxu0 0
  %157 = vmatmul.mubr.bf16.gmra.mrb[0].mxu0 %v54
  %v158 = vpop.f32.mrb[0].mxu0
  %v159 = vadd.f32 0.0, %v158
  %v160 = vpop.f32.mrb[0].mxu0
  %v161 = vpop.f32.mrb[0].mxu0
  %v162 = vadd.f32 0.0, %v161
  %v163 = vpop.f32.mrb[0].mxu0
  %164 = vmatprep.mubr.bf16.mxu0 0
  %165 = vmatmul.mubr.bf16.gmra.mrb[0].mxu0 %v55
  %v166 = vpop.f32.mrb[0].mxu0
  %v167 = vadd.f32 0.0, %v166
  %v168 = vpop.f32.mrb[0].mxu0
  %v169 = vpop.f32.mrb[0].mxu0
  %v170 = vadd.f32 0.0, %v169
  %v171 = vpop.f32.mrb[0].mxu0
  %172 = vdwg.mxu0
  %173 = vst [vmem:[%s2] sm:$0xff] %v143
  %174 = vst [vmem:[%s2 + $0x8] sm:$0xff] %v146
  %175 = vst [vmem:[%s2 + $0x10] sm:$0xff] %v151
  %176 = vst [vmem:[%s2 + $0x18] sm:$0xff] %v154
  %177 = vst [vmem:[%s2 + $0x20] sm:$0xff] %v159
  %178 = vst [vmem:[%s2 + $0x28] sm:$0xff] %v162
  %179 = vst [vmem:[%s2 + $0x30] sm:$0xff] %v167
  %180 = vst [vmem:[%s2 + $0x38] sm:$0xff] %v170
  // Predicated region
  $region10: #{rnn_language_model_forward.3} parent=0 // pred_check
    _
  $region11: #{rnn_language_model_forward.3} parent=0 // pred_check_branch
    %182 = sbr.rel (0) target = $region13
  $region12: #{rnn_language_model_forward.3} parent=0 // pred_region
    _
  $region13: #{rnn_language_model_forward.3} parent=0 // pred_fallthru
    _
  // Predicated region
  $region14: #{rnn_language_model_forward.3} parent=0 // pred_check
    _
  $region15: #{rnn_language_model_forward.3} parent=0 // pred_check_branch
    %184 = sbr.rel (0) target = $region17
  $region16: #{rnn_language_model_forward.3} parent=0 // pred_region
    _
  $region17: #{rnn_language_model_forward.3} parent=0 // pred_fallthru
    _

// kernel: rnn_language_model_forward.2
$region0: #{rnn_language_model_forward.2}
  #allocation0 [shape = 'u32[]', space=smem, size = 0x4, offset = 0x4, fixed_abs, tag = 'smem constant byte address 0x4 - core index']
  #allocation1 [shape = 'u32[144,128]{1,0:T(1,128)}', space=vmem, size = 0x12000, scoped, tag = 'internal scratch']
  #allocation2 [shape = 'f32[8,128]{1,0:T(8,128)}', space=vmem, size = 0x1000, scoped, tag = 'scratch operand']
  #allocation3 [shape = 'f32[8,128]{1,0:T(8,128)}', space=vmem, size = 0x1000, scoped, tag = 'scratch operand']
  #allocation4 [shape = 'f32[64,128]{1,0:T(8,128)}', space=vmem, size = 0x8000, scoped, tag = 'scratch operand']
  #allocation5 [shape = 'f32[64,128]{1,0:T(8,128)}', space=vmem, size = 0x8000, scoped, tag = 'scratch operand']
  %s0 = inlined_call_operand.vmem [shape: bf16[64,128], index: 0, kind: input, shape index: {}]
  %s1 = inlined_call_operand.vmem [shape: bf16[128,128], index: 1, kind: input, shape index: {}]
  %s2 = inlined_call_operand.vmem [shape: bf16[128,128], index: 2, kind: input, shape index: {}]
  %s3 = inlined_call_operand.vmem [shape: f32[1,128], index: 3, kind: input, shape index: {}]
  %s4 = inlined_call_operand.vmem [shape: bf16[128,128], index: 4, kind: input, shape index: {}]
  %s5 = inlined_call_operand.vmem [shape: bf16[128,128], index: 5, kind: input, shape index: {}]
  %s6 = inlined_call_operand.vmem [shape: f32[1,128], index: 6, kind: input, shape index: {}]
  %s7 = inlined_call_operand.vmem [shape: bf16[8,8,128], index: 7, kind: output, shape index: {}]
  %s8 = sld [smem:[#allocation0]]
  $region42: #{rnn_language_model_forward.2} parent=0
    _
  %s10 = ssub.s32 1, %s8
  %s11 = scalar_select 0, %s10, %s8
  // Predicated region
  $region2: #{rnn_language_model_forward.2} parent=0 // pred_check
    _
  $region3: #{rnn_language_model_forward.2} parent=0 // pred_check_branch
    %13 = sbr.rel (0) target = $region5
  $region4: #{rnn_language_model_forward.2} parent=0 // pred_region
    _
  $region5: #{rnn_language_model_forward.2} parent=0 // pred_fallthru
    _
  // Predicated region
  $region6: #{rnn_language_model_forward.2} parent=0 // pred_check
    _
  $region7: #{rnn_language_model_forward.2} parent=0 // pred_check_branch
    %15 = sbr.rel (0) target = $region9
  $region8: #{rnn_language_model_forward.2} parent=0 // pred_region
    _
  $region9: #{rnn_language_model_forward.2} parent=0 // pred_fallthru
    _
  // Predicated region
  $region10: #{rnn_language_model_forward.2} parent=0 // pred_check
    _
  $region11: #{rnn_language_model_forward.2} parent=0 // pred_check_branch
    %17 = sbr.rel (0) target = $region13
  $region12: #{rnn_language_model_forward.2} parent=0 // pred_region
    _
  $region13: #{rnn_language_model_forward.2} parent=0 // pred_fallthru
    _
  // Predicated region
  $region14: #{rnn_language_model_forward.2} parent=0 // pred_check
    _
  $region15: #{rnn_language_model_forward.2} parent=0 // pred_check_branch
    %19 = sbr.rel (0) target = $region17
  $region16: #{rnn_language_model_forward.2} parent=0 // pred_region
    _
  $region17: #{rnn_language_model_forward.2} parent=0 // pred_fallthru
    _
  // Predicated region
  $region18: #{rnn_language_model_forward.2} parent=0 // pred_check
    _
  $region19: #{rnn_language_model_forward.2} parent=0 // pred_check_branch
    %21 = sbr.rel (0) target = $region21
  $region20: #{rnn_language_model_forward.2} parent=0 // pred_region
    _
  $region21: #{rnn_language_model_forward.2} parent=0 // pred_fallthru
    _
  // Predicated region
  $region22: #{rnn_language_model_forward.2} parent=0 // pred_check
    _
  $region23: #{rnn_language_model_forward.2} parent=0 // pred_check_branch
    %23 = sbr.rel (0) target = $region25
  $region24: #{rnn_language_model_forward.2} parent=0 // pred_region
    _
  $region25: #{rnn_language_model_forward.2} parent=0 // pred_fallthru
    _
  // Predicated region
  $region26: #{rnn_language_model_forward.2} parent=0 // pred_check
    _
  $region27: #{rnn_language_model_forward.2} parent=0 // pred_check_branch
    %25 = sbr.rel (0) target = $region29
  $region28: #{rnn_language_model_forward.2} parent=0 // pred_region
    _
  $region29: #{rnn_language_model_forward.2} parent=0 // pred_fallthru
    _
  %p27 = scmp.eq.s32.totalorder 0, 0
  // Predicated region
  $region30: #{rnn_language_model_forward.2} parent=0 // pred_check
    %p28 = pneg %p27
  $region31: #{rnn_language_model_forward.2} parent=0 // pred_check_branch
    %30 = sbr.rel (%p28) target = $region33
  $region32: #{rnn_language_model_forward.2} parent=0 // pred_region
    %31 = vst [vmem:[#allocation2] sm:$0xff] 0.0
    %32 = vst [vmem:[#allocation3] sm:$0xff] 0.0
  $region33: #{rnn_language_model_forward.2} parent=0 // pred_fallthru
    _
  %v33 = vld [vmem:[%s0] sm:$0xf]
  %v34 = vld [vmem:[%s0 + $0x4] sm:$0xf]
  %v35 = vld [vmem:[%s0 + $0x8] sm:$0xf]
  %v36 = vld [vmem:[%s0 + $0xc] sm:$0xf]
  %v37 = vld [vmem:[%s0 + $0x10] sm:$0xf]
  %v38 = vld [vmem:[%s0 + $0x14] sm:$0xf]
  %v39 = vld [vmem:[%s0 + $0x18] sm:$0xf]
  %v40 = vld [vmem:[%s0 + $0x1c] sm:$0xf]
  %v41 = vld [vmem:[%s1] sm:$0xf]
  %v42 = vld [vmem:[%s1 + $0x4] sm:$0xf]
  %v43 = vld [vmem:[%s1 + $0x8] sm:$0xf]
  %v44 = vld [vmem:[%s1 + $0xc] sm:$0xf]
  %v45 = vld [vmem:[%s1 + $0x10] sm:$0xf]
  %v46 = vld [vmem:[%s1 + $0x14] sm:$0xf]
  %v47 = vld [vmem:[%s1 + $0x18] sm:$0xf]
  %v48 = vld [vmem:[%s1 + $0x1c] sm:$0xf]
  %v49 = vld [vmem:[%s1 + $0x20] sm:$0xf]
  %v50 = vld [vmem:[%s1 + $0x24] sm:$0xf]
  %v51 = vld [vmem:[%s1 + $0x28] sm:$0xf]
  %v52 = vld [vmem:[%s1 + $0x2c] sm:$0xf]
  %v53 = vld [vmem:[%s1 + $0x30] sm:$0xf]
  %v54 = vld [vmem:[%s1 + $0x34] sm:$0xf]
  %v55 = vld [vmem:[%s1 + $0x38] sm:$0xf]
  %v56 = vld [vmem:[%s1 + $0x3c] sm:$0xf]
  %v65 = vunpack.c.l.b16 %v33
  %v66 = vunpack.c.l.b16 %v34
  %v67 = vunpack.c.l.b16 %v35
  %v68 = vunpack.c.l.b16 %v36
  %v69 = vunpack.c.l.b16 %v37
  %v70 = vunpack.c.l.b16 %v38
  %v71 = vunpack.c.l.b16 %v39
  %v72 = vunpack.c.l.b16 %v40
  %v73 = vpack.c.b16 %v66, %v65
  %v74 = vpack.c.b16 %v68, %v67
  %v75 = vpack.c.b16 %v70, %v69
  %v76 = vpack.c.b16 %v72, %v71
  %v97 = vunpack.c.l.b16 %v41
  %v98 = vunpack.c.l.b16 %v42
  %v99 = vunpack.c.l.b16 %v43
  %v100 = vunpack.c.l.b16 %v44
  %v101 = vunpack.c.l.b16 %v45
  %v102 = vunpack.c.l.b16 %v46
  %v103 = vunpack.c.l.b16 %v47
  %v104 = vunpack.c.l.b16 %v48
  %v105 = vunpack.c.l.b16 %v49
  %v106 = vunpack.c.l.b16 %v50
  %v107 = vunpack.c.l.b16 %v51
  %v108 = vunpack.c.l.b16 %v52
  %v109 = vunpack.c.l.b16 %v53
  %v110 = vunpack.c.l.b16 %v54
  %v111 = vunpack.c.l.b16 %v55
  %v112 = vunpack.c.l.b16 %v56
  %v113 = vpack.c.b16 %v98, %v97
  %v114 = vpack.c.b16 %v100, %v99
  %v115 = vpack.c.b16 %v102, %v101
  %v116 = vpack.c.b16 %v104, %v103
  %v117 = vpack.c.b16 %v106, %v105
  %v118 = vpack.c.b16 %v108, %v107
  %v119 = vpack.c.b16 %v110, %v109
  %v120 = vpack.c.b16 %v112, %v111
  %129 = vmatprep.subr.bf16.mxu0 0
  %130 = vmatpush1.bf16.msra.mxu0 %v113
  %131 = vmatprep.subr.bf16.mxu0 0
  %132 = vmatpush1.bf16.msra.mxu0 %v114
  %133 = vmatprep.subr.bf16.mxu0 0
  %134 = vmatpush1.bf16.msra.mxu0 %v115
  %135 = vmatprep.subr.bf16.mxu0 0
  %136 = vmatpush1.bf16.msra.mxu0 %v116
  %137 = vmatprep.subr.bf16.mxu0 0
  %138 = vmatpush1.bf16.msra.mxu0 %v117
  %139 = vmatprep.subr.bf16.mxu0 0
  %140 = vmatpush1.bf16.msra.mxu0 %v118
  %141 = vmatprep.subr.bf16.mxu0 0
  %142 = vmatpush1.bf16.msra.mxu0 %v119
  %143 = vmatprep.subr.bf16.mxu0 0
  %144 = vmatpush1.bf16.msra.mxu0 %v120
  %145 = vmatprep.subr.bf16.mxu0 0
  %146 = vmatpush1.bf16.msra.mxu0 0
  %147 = vmatprep.subr.bf16.mxu0 0
  %148 = vmatpush1.bf16.msra.mxu0 0
  %149 = vmatprep.subr.bf16.mxu0 0
  %150 = vmatpush1.bf16.msra.mxu0 0
  %151 = vmatprep.subr.bf16.mxu0 0
  %152 = vmatpush1.bf16.msra.mxu0 0
  %153 = vmatprep.subr.bf16.mxu0 0
  %154 = vmatpush1.bf16.msra.mxu0 0
  %155 = vmatprep.subr.bf16.mxu0 0
  %156 = vmatpush1.bf16.msra.mxu0 0
  %157 = vmatprep.subr.bf16.mxu0 0
  %158 = vmatpush1.bf16.msra.mxu0 0
  %159 = vmatprep.subr.bf16.mxu0 0
  %160 = vmatpush1.bf16.msra.mxu0 0
  %161 = vmatprep.mubr.bf16.mxu0 0
  %162 = vmatmul.mubr.bf16.gmra.mrb[0].mxu0 %v73
  %v163 = vpop.f32.mrb[0].mxu0
  %v164 = vadd.f32 0.0, %v163
  %v165 = vpop.f32.mrb[0].mxu0
  %v166 = vpop.f32.mrb[0].mxu0
  %v167 = vadd.f32 0.0, %v166
  %v168 = vpop.f32.mrb[0].mxu0
  %169 = vmatprep.mubr.bf16.mxu0 0
  %170 = vmatmul.mubr.bf16.gmra.mrb[0].mxu0 %v74
  %v171 = vpop.f32.mrb[0].mxu0
  %v172 = vadd.f32 0.0, %v171
  %v173 = vpop.f32.mrb[0].mxu0
  %v174 = vpop.f32.mrb[0].mxu0
  %v175 = vadd.f32 0.0, %v174
  %v176 = vpop.f32.mrb[0].mxu0
  %177 = vmatprep.mubr.bf16.mxu0 0
  %178 = vmatmul.mubr.bf16.gmra.mrb[0].mxu0 %v75
  %v179 = vpop.f32.mrb[0].mxu0
  %v180 = vadd.f32 0.0, %v179
  %v181 = vpop.f32.mrb[0].mxu0
  %v182 = vpop.f32.mrb[0].mxu0
  %v183 = vadd.f32 0.0, %v182
  %v184 = vpop.f32.mrb[0].mxu0
  %185 = vmatprep.mubr.bf16.mxu0 0
  %186 = vmatmul.mubr.bf16.gmra.mrb[0].mxu0 %v76
  %v187 = vpop.f32.mrb[0].mxu0
  %v188 = vadd.f32 0.0, %v187
  %v189 = vpop.f32.mrb[0].mxu0
  %v190 = vpop.f32.mrb[0].mxu0
  %v191 = vadd.f32 0.0, %v190
  %v192 = vpop.f32.mrb[0].mxu0
  %193 = vdwg.mxu0
  %194 = vst [vmem:[#allocation4] sm:$0xff] %v164
  %195 = vst [vmem:[#allocation4 + $0x8] sm:$0xff] %v167
  %196 = vst [vmem:[#allocation4 + $0x10] sm:$0xff] %v172
  %197 = vst [vmem:[#allocation4 + $0x18] sm:$0xff] %v175
  %198 = vst [vmem:[#allocation4 + $0x20] sm:$0xff] %v180
  %199 = vst [vmem:[#allocation4 + $0x28] sm:$0xff] %v183
  %200 = vst [vmem:[#allocation4 + $0x30] sm:$0xff] %v188
  %201 = vst [vmem:[#allocation4 + $0x38] sm:$0xff] %v191
  %v202 = vld [vmem:[%s2] sm:$0xf]
  %v203 = vld [vmem:[%s2 + $0x4] sm:$0xf]
  %v204 = vld [vmem:[%s2 + $0x8] sm:$0xf]
  %v205 = vld [vmem:[%s2 + $0xc] sm:$0xf]
  %v206 = vld [vmem:[%s2 + $0x10] sm:$0xf]
  %v207 = vld [vmem:[%s2 + $0x14] sm:$0xf]
  %v208 = vld [vmem:[%s2 + $0x18] sm:$0xf]
  %v209 = vld [vmem:[%s2 + $0x1c] sm:$0xf]
  %v210 = vld [vmem:[%s2 + $0x20] sm:$0xf]
  %v211 = vld [vmem:[%s2 + $0x24] sm:$0xf]
  %v212 = vld [vmem:[%s2 + $0x28] sm:$0xf]
  %v213 = vld [vmem:[%s2 + $0x2c] sm:$0xf]
  %v214 = vld [vmem:[%s2 + $0x30] sm:$0xf]
  %v215 = vld [vmem:[%s2 + $0x34] sm:$0xf]
  %v216 = vld [vmem:[%s2 + $0x38] sm:$0xf]
  %v217 = vld [vmem:[%s2 + $0x3c] sm:$0xf]
  %v218 = vld [vmem:[%s3] sm:$0x1]
  %v219 = vld [vmem:[#allocation2] sm:$0xff]
  %v220 = vld [vmem:[#allocation4] sm:$0xff]
  %v222 = vlaneseq
  %v223 = vshrl.u32 %v222, 7
  %v224 = vsub.s32 0, %v223
  %v225 = vrot.slane %v218, %v224
  %v227 = vadd.f32 %v220, %v225
  %v228 = vpack.c.bf16 %v219, %v219
  %v245 = vunpack.c.l.b16 %v202
  %v246 = vunpack.c.l.b16 %v203
  %v247 = vunpack.c.l.b16 %v204
  %v248 = vunpack.c.l.b16 %v205
  %v249 = vunpack.c.l.b16 %v206
  %v250 = vunpack.c.l.b16 %v207
  %v251 = vunpack.c.l.b16 %v208
  %v252 = vunpack.c.l.b16 %v209
  %v253 = vunpack.c.l.b16 %v210
  %v254 = vunpack.c.l.b16 %v211
  %v255 = vunpack.c.l.b16 %v212
  %v256 = vunpack.c.l.b16 %v213
  %v257 = vunpack.c.l.b16 %v214
  %v258 = vunpack.c.l.b16 %v215
  %v259 = vunpack.c.l.b16 %v216
  %v260 = vunpack.c.l.b16 %v217
  %v261 = vpack.c.b16 %v246, %v245
  %v262 = vpack.c.b16 %v248, %v247
  %v263 = vpack.c.b16 %v250, %v249
  %v264 = vpack.c.b16 %v252, %v251
  %v265 = vpack.c.b16 %v254, %v253
  %v266 = vpack.c.b16 %v256, %v255
  %v267 = vpack.c.b16 %v258, %v257
  %v268 = vpack.c.b16 %v260, %v259
  %277 = vmatprep.subr.bf16.mxu0 0
  %278 = vmatpush1.bf16.msra.mxu0 %v261
  %279 = vmatprep.subr.bf16.mxu0 0
  %280 = vmatpush1.bf16.msra.mxu0 %v262
  %281 = vmatprep.subr.bf16.mxu0 0
  %282 = vmatpush1.bf16.msra.mxu0 %v263
  %283 = vmatprep.subr.bf16.mxu0 0
  %284 = vmatpush1.bf16.msra.mxu0 %v264
  %285 = vmatprep.subr.bf16.mxu0 0
  %286 = vmatpush1.bf16.msra.mxu0 %v265
  %287 = vmatprep.subr.bf16.mxu0 0
  %288 = vmatpush1.bf16.msra.mxu0 %v266
  %289 = vmatprep.subr.bf16.mxu0 0
  %290 = vmatpush1.bf16.msra.mxu0 %v267
  %291 = vmatprep.subr.bf16.mxu0 0
  %292 = vmatpush1.bf16.msra.mxu0 %v268
  %293 = vmatprep.subr.bf16.mxu0 0
  %294 = vmatpush1.bf16.msra.mxu0 0
  %295 = vmatprep.subr.bf16.mxu0 0
  %296 = vmatpush1.bf16.msra.mxu0 0
  %297 = vmatprep.subr.bf16.mxu0 0
  %298 = vmatpush1.bf16.msra.mxu0 0
  %299 = vmatprep.subr.bf16.mxu0 0
  %300 = vmatpush1.bf16.msra.mxu0 0
  %301 = vmatprep.subr.bf16.mxu0 0
  %302 = vmatpush1.bf16.msra.mxu0 0
  %303 = vmatprep.subr.bf16.mxu0 0
  %304 = vmatpush1.bf16.msra.mxu0 0
  %305 = vmatprep.subr.bf16.mxu0 0
  %306 = vmatpush1.bf16.msra.mxu0 0
  %307 = vmatprep.subr.bf16.mxu0 0
  %308 = vmatpush1.bf16.msra.mxu0 0
  %309 = vmatprep.mubr.bf16.mxu0 0
  %310 = vmatmul.mubr.bf16.gmra.mrb[0].mxu0 %v228
  %v311 = vpop.f32.mrb[0].mxu0
  %v312 = vadd.f32 0.0, %v311
  %v313 = vpop.f32.mrb[0].mxu0
  %v314 = vpop.f32.mrb[0].mxu0
  %v315 = vpop.f32.mrb[0].mxu0
  %316 = vdwg.mxu0
  %v317 = vadd.f32 %v227, %v312
  %v318 = vmax.f32 %v317, 0.0
  %319 = vst [vmem:[#allocation5] sm:$0xff] %v318
  %v320 = vld [vmem:[#allocation4 + $0x8] sm:$0xff]
  %v321 = vadd.f32 %v320, %v225
  %v322 = vpack.c.bf16 %v318, %v318
  %323 = vmatprep.subr.bf16.mxu0 0
  %324 = vmatpush1.bf16.msra.mxu0 %v261
  %325 = vmatprep.subr.bf16.mxu0 0
  %326 = vmatpush1.bf16.msra.mxu0 %v262
  %327 = vmatprep.subr.bf16.mxu0 0
  %328 = vmatpush1.bf16.msra.mxu0 %v263
  %329 = vmatprep.subr.bf16.mxu0 0
  %330 = vmatpush1.bf16.msra.mxu0 %v264
  %331 = vmatprep.subr.bf16.mxu0 0
  %332 = vmatpush1.bf16.msra.mxu0 %v265
  %333 = vmatprep.subr.bf16.mxu0 0
  %334 = vmatpush1.bf16.msra.mxu0 %v266
  %335 = vmatprep.subr.bf16.mxu0 0
  %336 = vmatpush1.bf16.msra.mxu0 %v267
  %337 = vmatprep.subr.bf16.mxu0 0
  %338 = vmatpush1.bf16.msra.mxu0 %v268
  %339 = vmatprep.subr.bf16.mxu0 0
  %340 = vmatpush1.bf16.msra.mxu0 0
  %341 = vmatprep.subr.bf16.mxu0 0
  %342 = vmatpush1.bf16.msra.mxu0 0
  %343 = vmatprep.subr.bf16.mxu0 0
  %344 = vmatpush1.bf16.msra.mxu0 0
  %345 = vmatprep.subr.bf16.mxu0 0
  %346 = vmatpush1.bf16.msra.mxu0 0
  %347 = vmatprep.subr.bf16.mxu0 0
  %348 = vmatpush1.bf16.msra.mxu0 0
  %349 = vmatprep.subr.bf16.mxu0 0
  %350 = vmatpush1.bf16.msra.mxu0 0
  %351 = vmatprep.subr.bf16.mxu0 0
  %352 = vmatpush1.bf16.msra.mxu0 0
  %353 = vmatprep.subr.bf16.mxu0 0
  %354 = vmatpush1.bf16.msra.mxu0 0
  %355 = vmatprep.mubr.bf16.mxu0 0
  %356 = vmatmul.mubr.bf16.gmra.mrb[0].mxu0 %v322
  %v357 = vpop.f32.mrb[0].mxu0
  %v358 = vadd.f32 0.0, %v357
  %v359 = vpop.f32.mrb[0].mxu0
  %v360 = vpop.f32.mrb[0].mxu0
  %v361 = vpop.f32.mrb[0].mxu0
  %362 = vdwg.mxu0
  %v363 = vadd.f32 %v321, %v358
  %v364 = vmax.f32 %v363, 0.0
  %365 = vst [vmem:[#allocation5 + $0x8] sm:$0xff] %v364
  %v366 = vld [vmem:[#allocation4 + $0x10] sm:$0xff]
  %v367 = vadd.f32 %v366, %v225
  %v368 = vpack.c.bf16 %v364, %v364
  %369 = vmatprep.subr.bf16.mxu0 0
  %370 = vmatpush1.bf16.msra.mxu0 %v261
  %371 = vmatprep.subr.bf16.mxu0 0
  %372 = vmatpush1.bf16.msra.mxu0 %v262
  %373 = vmatprep.subr.bf16.mxu0 0
  %374 = vmatpush1.bf16.msra.mxu0 %v263
  %375 = vmatprep.subr.bf16.mxu0 0
  %376 = vmatpush1.bf16.msra.mxu0 %v264
  %377 = vmatprep.subr.bf16.mxu0 0
  %378 = vmatpush1.bf16.msra.mxu0 %v265
  %379 = vmatprep.subr.bf16.mxu0 0
  %380 = vmatpush1.bf16.msra.mxu0 %v266
  %381 = vmatprep.subr.bf16.mxu0 0
  %382 = vmatpush1.bf16.msra.mxu0 %v267
  %383 = vmatprep.subr.bf16.mxu0 0
  %384 = vmatpush1.bf16.msra.mxu0 %v268
  %385 = vmatprep.subr.bf16.mxu0 0
  %386 = vmatpush1.bf16.msra.mxu0 0
  %387 = vmatprep.subr.bf16.mxu0 0
  %388 = vmatpush1.bf16.msra.mxu0 0
  %389 = vmatprep.subr.bf16.mxu0 0
  %390 = vmatpush1.bf16.msra.mxu0 0
  %391 = vmatprep.subr.bf16.mxu0 0
  %392 = vmatpush1.bf16.msra.mxu0 0
  %393 = vmatprep.subr.bf16.mxu0 0
  %394 = vmatpush1.bf16.msra.mxu0 0
  %395 = vmatprep.subr.bf16.mxu0 0
  %396 = vmatpush1.bf16.msra.mxu0 0
  %397 = vmatprep.subr.bf16.mxu0 0
  %398 = vmatpush1.bf16.msra.mxu0 0
  %399 = vmatprep.subr.bf16.mxu0 0
  %400 = vmatpush1.bf16.msra.mxu0 0
  %401 = vmatprep.mubr.bf16.mxu0 0
  %402 = vmatmul.mubr.bf16.gmra.mrb[0].mxu0 %v368
  %v403 = vpop.f32.mrb[0].mxu0
  %v404 = vadd.f32 0.0, %v403
  %v405 = vpop.f32.mrb[0].mxu0
  %v406 = vpop.f32.mrb[0].mxu0
  %v407 = vpop.f32.mrb[0].mxu0
  %408 = vdwg.mxu0
  %v409 = vadd.f32 %v367, %v404
  %v410 = vmax.f32 %v409, 0.0
  %411 = vst [vmem:[#allocation5 + $0x10] sm:$0xff] %v410
  %v412 = vld [vmem:[#allocation4 + $0x18] sm:$0xff]
  %v413 = vadd.f32 %v412, %v225
  %v414 = vpack.c.bf16 %v410, %v410
  %415 = vmatprep.subr.bf16.mxu0 0
  %416 = vmatpush1.bf16.msra.mxu0 %v261
  %417 = vmatprep.subr.bf16.mxu0 0
  %418 = vmatpush1.bf16.msra.mxu0 %v262
  %419 = vmatprep.subr.bf16.mxu0 0
  %420 = vmatpush1.bf16.msra.mxu0 %v263
  %421 = vmatprep.subr.bf16.mxu0 0
  %422 = vmatpush1.bf16.msra.mxu0 %v264
  %423 = vmatprep.subr.bf16.mxu0 0
  %424 = vmatpush1.bf16.msra.mxu0 %v265
  %425 = vmatprep.subr.bf16.mxu0 0
  %426 = vmatpush1.bf16.msra.mxu0 %v266
  %427 = vmatprep.subr.bf16.mxu0 0
  %428 = vmatpush1.bf16.msra.mxu0 %v267
  %429 = vmatprep.subr.bf16.mxu0 0
  %430 = vmatpush1.bf16.msra.mxu0 %v268
  %431 = vmatprep.subr.bf16.mxu0 0
  %432 = vmatpush1.bf16.msra.mxu0 0
  %433 = vmatprep.subr.bf16.mxu0 0
  %434 = vmatpush1.bf16.msra.mxu0 0
  %435 = vmatprep.subr.bf16.mxu0 0
  %436 = vmatpush1.bf16.msra.mxu0 0
  %437 = vmatprep.subr.bf16.mxu0 0
  %438 = vmatpush1.bf16.msra.mxu0 0
  %439 = vmatprep.subr.bf16.mxu0 0
  %440 = vmatpush1.bf16.msra.mxu0 0
  %441 = vmatprep.subr.bf16.mxu0 0
  %442 = vmatpush1.bf16.msra.mxu0 0
  %443 = vmatprep.subr.bf16.mxu0 0
  %444 = vmatpush1.bf16.msra.mxu0 0
  %445 = vmatprep.subr.bf16.mxu0 0
  %446 = vmatpush1.bf16.msra.mxu0 0
  %447 = vmatprep.mubr.bf16.mxu0 0
  %448 = vmatmul.mubr.bf16.gmra.mrb[0].mxu0 %v414
  %v449 = vpop.f32.mrb[0].mxu0
  %v450 = vadd.f32 0.0, %v449
  %v451 = vpop.f32.mrb[0].mxu0
  %v452 = vpop.f32.mrb[0].mxu0
  %v453 = vpop.f32.mrb[0].mxu0
  %454 = vdwg.mxu0
  %v455 = vadd.f32 %v413, %v450
  %v456 = vmax.f32 %v455, 0.0
  %457 = vst [vmem:[#allocation5 + $0x18] sm:$0xff] %v456
  %v458 = vld [vmem:[#allocation4 + $0x20] sm:$0xff]
  %v459 = vadd.f32 %v458, %v225
  %v460 = vpack.c.bf16 %v456, %v456
  %461 = vmatprep.subr.bf16.mxu0 0
  %462 = vmatpush1.bf16.msra.mxu0 %v261
  %463 = vmatprep.subr.bf16.mxu0 0
  %464 = vmatpush1.bf16.msra.mxu0 %v262
  %465 = vmatprep.subr.bf16.mxu0 0
  %466 = vmatpush1.bf16.msra.mxu0 %v263
  %467 = vmatprep.subr.bf16.mxu0 0
  %468 = vmatpush1.bf16.msra.mxu0 %v264
  %469 = vmatprep.subr.bf16.mxu0 0
  %470 = vmatpush1.bf16.msra.mxu0 %v265
  %471 = vmatprep.subr.bf16.mxu0 0
  %472 = vmatpush1.bf16.msra.mxu0 %v266
  %473 = vmatprep.subr.bf16.mxu0 0
  %474 = vmatpush1.bf16.msra.mxu0 %v267
  %475 = vmatprep.subr.bf16.mxu0 0
  %476 = vmatpush1.bf16.msra.mxu0 %v268
  %477 = vmatprep.subr.bf16.mxu0 0
  %478 = vmatpush1.bf16.msra.mxu0 0
  %479 = vmatprep.subr.bf16.mxu0 0
  %480 = vmatpush1.bf16.msra.mxu0 0
  %481 = vmatprep.subr.bf16.mxu0 0
  %482 = vmatpush1.bf16.msra.mxu0 0
  %483 = vmatprep.subr.bf16.mxu0 0
  %484 = vmatpush1.bf16.msra.mxu0 0
  %485 = vmatprep.subr.bf16.mxu0 0
  %486 = vmatpush1.bf16.msra.mxu0 0
  %487 = vmatprep.subr.bf16.mxu0 0
  %488 = vmatpush1.bf16.msra.mxu0 0
  %489 = vmatprep.subr.bf16.mxu0 0
  %490 = vmatpush1.bf16.msra.mxu0 0
  %491 = vmatprep.subr.bf16.mxu0 0
  %492 = vmatpush1.bf16.msra.mxu0 0
  %493 = vmatprep.mubr.bf16.mxu0 0
  %494 = vmatmul.mubr.bf16.gmra.mrb[0].mxu0 %v460
  %v495 = vpop.f32.mrb[0].mxu0
  %v496 = vadd.f32 0.0, %v495
  %v497 = vpop.f32.mrb[0].mxu0
  %v498 = vpop.f32.mrb[0].mxu0
  %v499 = vpop.f32.mrb[0].mxu0
  %500 = vdwg.mxu0
  %v501 = vadd.f32 %v459, %v496
  %v502 = vmax.f32 %v501, 0.0
  %503 = vst [vmem:[#allocation5 + $0x20] sm:$0xff] %v502
  %v504 = vld [vmem:[#allocation4 + $0x28] sm:$0xff]
  %v505 = vadd.f32 %v504, %v225
  %v506 = vpack.c.bf16 %v502, %v502
  %507 = vmatprep.subr.bf16.mxu0 0
  %508 = vmatpush1.bf16.msra.mxu0 %v261
  %509 = vmatprep.subr.bf16.mxu0 0
  %510 = vmatpush1.bf16.msra.mxu0 %v262
  %511 = vmatprep.subr.bf16.mxu0 0
  %512 = vmatpush1.bf16.msra.mxu0 %v263
  %513 = vmatprep.subr.bf16.mxu0 0
  %514 = vmatpush1.bf16.msra.mxu0 %v264
  %515 = vmatprep.subr.bf16.mxu0 0
  %516 = vmatpush1.bf16.msra.mxu0 %v265
  %517 = vmatprep.subr.bf16.mxu0 0
  %518 = vmatpush1.bf16.msra.mxu0 %v266
  %519 = vmatprep.subr.bf16.mxu0 0
  %520 = vmatpush1.bf16.msra.mxu0 %v267
  %521 = vmatprep.subr.bf16.mxu0 0
  %522 = vmatpush1.bf16.msra.mxu0 %v268
  %523 = vmatprep.subr.bf16.mxu0 0
  %524 = vmatpush1.bf16.msra.mxu0 0
  %525 = vmatprep.subr.bf16.mxu0 0
  %526 = vmatpush1.bf16.msra.mxu0 0
  %527 = vmatprep.subr.bf16.mxu0 0
  %528 = vmatpush1.bf16.msra.mxu0 0
  %529 = vmatprep.subr.bf16.mxu0 0
  %530 = vmatpush1.bf16.msra.mxu0 0
  %531 = vmatprep.subr.bf16.mxu0 0
  %532 = vmatpush1.bf16.msra.mxu0 0
  %533 = vmatprep.subr.bf16.mxu0 0
  %534 = vmatpush1.bf16.msra.mxu0 0
  %535 = vmatprep.subr.bf16.mxu0 0
  %536 = vmatpush1.bf16.msra.mxu0 0
  %537 = vmatprep.subr.bf16.mxu0 0
  %538 = vmatpush1.bf16.msra.mxu0 0
  %539 = vmatprep.mubr.bf16.mxu0 0
  %540 = vmatmul.mubr.bf16.gmra.mrb[0].mxu0 %v506
  %v541 = vpop.f32.mrb[0].mxu0
  %v542 = vadd.f32 0.0, %v541
  %v543 = vpop.f32.mrb[0].mxu0
  %v544 = vpop.f32.mrb[0].mxu0
  %v545 = vpop.f32.mrb[0].mxu0
  %546 = vdwg.mxu0
  %v547 = vadd.f32 %v505, %v542
  %v548 = vmax.f32 %v547, 0.0
  %549 = vst [vmem:[#allocation5 + $0x28] sm:$0xff] %v548
  %v550 = vld [vmem:[#allocation4 + $0x30] sm:$0xff]
  %v551 = vadd.f32 %v550, %v225
  %v552 = vpack.c.bf16 %v548, %v548
  %553 = vmatprep.subr.bf16.mxu0 0
  %554 = vmatpush1.bf16.msra.mxu0 %v261
  %555 = vmatprep.subr.bf16.mxu0 0
  %556 = vmatpush1.bf16.msra.mxu0 %v262
  %557 = vmatprep.subr.bf16.mxu0 0
  %558 = vmatpush1.bf16.msra.mxu0 %v263
  %559 = vmatprep.subr.bf16.mxu0 0
  %560 = vmatpush1.bf16.msra.mxu0 %v264
  %561 = vmatprep.subr.bf16.mxu0 0
  %562 = vmatpush1.bf16.msra.mxu0 %v265
  %563 = vmatprep.subr.bf16.mxu0 0
  %564 = vmatpush1.bf16.msra.mxu0 %v266
  %565 = vmatprep.subr.bf16.mxu0 0
  %566 = vmatpush1.bf16.msra.mxu0 %v267
  %567 = vmatprep.subr.bf16.mxu0 0
  %568 = vmatpush1.bf16.msra.mxu0 %v268
  %569 = vmatprep.subr.bf16.mxu0 0
  %570 = vmatpush1.bf16.msra.mxu0 0
  %571 = vmatprep.subr.bf16.mxu0 0
  %572 = vmatpush1.bf16.msra.mxu0 0
  %573 = vmatprep.subr.bf16.mxu0 0
  %574 = vmatpush1.bf16.msra.mxu0 0
  %575 = vmatprep.subr.bf16.mxu0 0
  %576 = vmatpush1.bf16.msra.mxu0 0
  %577 = vmatprep.subr.bf16.mxu0 0
  %578 = vmatpush1.bf16.msra.mxu0 0
  %579 = vmatprep.subr.bf16.mxu0 0
  %580 = vmatpush1.bf16.msra.mxu0 0
  %581 = vmatprep.subr.bf16.mxu0 0
  %582 = vmatpush1.bf16.msra.mxu0 0
  %583 = vmatprep.subr.bf16.mxu0 0
  %584 = vmatpush1.bf16.msra.mxu0 0
  %585 = vmatprep.mubr.bf16.mxu0 0
  %586 = vmatmul.mubr.bf16.gmra.mrb[0].mxu0 %v552
  %v587 = vpop.f32.mrb[0].mxu0
  %v588 = vadd.f32 0.0, %v587
  %v589 = vpop.f32.mrb[0].mxu0
  %v590 = vpop.f32.mrb[0].mxu0
  %v591 = vpop.f32.mrb[0].mxu0
  %592 = vdwg.mxu0
  %v593 = vadd.f32 %v551, %v588
  %v594 = vmax.f32 %v593, 0.0
  %595 = vst [vmem:[#allocation5 + $0x30] sm:$0xff] %v594
  %v596 = vld [vmem:[#allocation4 + $0x38] sm:$0xff]
  %v597 = vadd.f32 %v596, %v225
  %v598 = vpack.c.bf16 %v594, %v594
  %599 = vmatprep.subr.bf16.mxu0 0
  %600 = vmatpush1.bf16.msra.mxu0 %v261
  %601 = vmatprep.subr.bf16.mxu0 0
  %602 = vmatpush1.bf16.msra.mxu0 %v262
  %603 = vmatprep.subr.bf16.mxu0 0
  %604 = vmatpush1.bf16.msra.mxu0 %v263
  %605 = vmatprep.subr.bf16.mxu0 0
  %606 = vmatpush1.bf16.msra.mxu0 %v264
  %607 = vmatprep.subr.bf16.mxu0 0
  %608 = vmatpush1.bf16.msra.mxu0 %v265
  %609 = vmatprep.subr.bf16.mxu0 0
  %610 = vmatpush1.bf16.msra.mxu0 %v266
  %611 = vmatprep.subr.bf16.mxu0 0
  %612 = vmatpush1.bf16.msra.mxu0 %v267
  %613 = vmatprep.subr.bf16.mxu0 0
  %614 = vmatpush1.bf16.msra.mxu0 %v268
  %615 = vmatprep.subr.bf16.mxu0 0
  %616 = vmatpush1.bf16.msra.mxu0 0
  %617 = vmatprep.subr.bf16.mxu0 0
  %618 = vmatpush1.bf16.msra.mxu0 0
  %619 = vmatprep.subr.bf16.mxu0 0
  %620 = vmatpush1.bf16.msra.mxu0 0
  %621 = vmatprep.subr.bf16.mxu0 0
  %622 = vmatpush1.bf16.msra.mxu0 0
  %623 = vmatprep.subr.bf16.mxu0 0
  %624 = vmatpush1.bf16.msra.mxu0 0
  %625 = vmatprep.subr.bf16.mxu0 0
  %626 = vmatpush1.bf16.msra.mxu0 0
  %627 = vmatprep.subr.bf16.mxu0 0
  %628 = vmatpush1.bf16.msra.mxu0 0
  %629 = vmatprep.subr.bf16.mxu0 0
  %630 = vmatpush1.bf16.msra.mxu0 0
  %631 = vmatprep.mubr.bf16.mxu0 0
  %632 = vmatmul.mubr.bf16.gmra.mrb[0].mxu0 %v598
  %v633 = vpop.f32.mrb[0].mxu0
  %v634 = vadd.f32 0.0, %v633
  %v635 = vpop.f32.mrb[0].mxu0
  %v636 = vpop.f32.mrb[0].mxu0
  %v637 = vpop.f32.mrb[0].mxu0
  %638 = vdwg.mxu0
  %v639 = vadd.f32 %v597, %v634
  %v640 = vmax.f32 %v639, 0.0
  %641 = vst [vmem:[#allocation5 + $0x38] sm:$0xff] %v640
  %642 = vst [vmem:[#allocation2] sm:$0xff] %v640
  %v643 = vld [vmem:[#allocation5] sm:$0xff]
  %v644 = vld [vmem:[#allocation5 + $0x8] sm:$0xff]
  %v645 = vld [vmem:[#allocation5 + $0x10] sm:$0xff]
  %v646 = vld [vmem:[#allocation5 + $0x18] sm:$0xff]
  %v647 = vld [vmem:[#allocation5 + $0x20] sm:$0xff]
  %v648 = vld [vmem:[#allocation5 + $0x28] sm:$0xff]
  %v649 = vld [vmem:[#allocation5 + $0x30] sm:$0xff]
  %v650 = vld [vmem:[#allocation5 + $0x38] sm:$0xff]
  %v651 = vpack.c.bf16 %v644, %v643
  %v652 = vpack.c.bf16 %v646, %v645
  %v653 = vpack.c.bf16 %v648, %v647
  %v654 = vpack.c.bf16 %v650, %v649
  %v655 = vld [vmem:[%s4] sm:$0xf]
  %v656 = vld [vmem:[%s4 + $0x4] sm:$0xf]
  %v657 = vld [vmem:[%s4 + $0x8] sm:$0xf]
  %v658 = vld [vmem:[%s4 + $0xc] sm:$0xf]
  %v659 = vld [vmem:[%s4 + $0x10] sm:$0xf]
  %v660 = vld [vmem:[%s4 + $0x14] sm:$0xf]
  %v661 = vld [vmem:[%s4 + $0x18] sm:$0xf]
  %v662 = vld [vmem:[%s4 + $0x1c] sm:$0xf]
  %v663 = vld [vmem:[%s4 + $0x20] sm:$0xf]
  %v664 = vld [vmem:[%s4 + $0x24] sm:$0xf]
  %v665 = vld [vmem:[%s4 + $0x28] sm:$0xf]
  %v666 = vld [vmem:[%s4 + $0x2c] sm:$0xf]
  %v667 = vld [vmem:[%s4 + $0x30] sm:$0xf]
  %v668 = vld [vmem:[%s4 + $0x34] sm:$0xf]
  %v669 = vld [vmem:[%s4 + $0x38] sm:$0xf]
  %v670 = vld [vmem:[%s4 + $0x3c] sm:$0xf]
  %v687 = vunpack.c.l.b16 %v655
  %v688 = vunpack.c.l.b16 %v656
  %v689 = vunpack.c.l.b16 %v657
  %v690 = vunpack.c.l.b16 %v658
  %v691 = vunpack.c.l.b16 %v659
  %v692 = vunpack.c.l.b16 %v660
  %v693 = vunpack.c.l.b16 %v661
  %v694 = vunpack.c.l.b16 %v662
  %v695 = vunpack.c.l.b16 %v663
  %v696 = vunpack.c.l.b16 %v664
  %v697 = vunpack.c.l.b16 %v665
  %v698 = vunpack.c.l.b16 %v666
  %v699 = vunpack.c.l.b16 %v667
  %v700 = vunpack.c.l.b16 %v668
  %v701 = vunpack.c.l.b16 %v669
  %v702 = vunpack.c.l.b16 %v670
  %v703 = vpack.c.b16 %v688, %v687
  %v704 = vpack.c.b16 %v690, %v689
  %v705 = vpack.c.b16 %v692, %v691
  %v706 = vpack.c.b16 %v694, %v693
  %v707 = vpack.c.b16 %v696, %v695
  %v708 = vpack.c.b16 %v698, %v697
  %v709 = vpack.c.b16 %v700, %v699
  %v710 = vpack.c.b16 %v702, %v701
  %719 = vmatprep.subr.bf16.mxu0 0
  %720 = vmatpush1.bf16.msra.mxu0 %v703
  %721 = vmatprep.subr.bf16.mxu0 0
  %722 = vmatpush1.bf16.msra.mxu0 %v704
  %723 = vmatprep.subr.bf16.mxu0 0
  %724 = vmatpush1.bf16.msra.mxu0 %v705
  %725 = vmatprep.subr.bf16.mxu0 0
  %726 = vmatpush1.bf16.msra.mxu0 %v706
  %727 = vmatprep.subr.bf16.mxu0 0
  %728 = vmatpush1.bf16.msra.mxu0 %v707
  %729 = vmatprep.subr.bf16.mxu0 0
  %730 = vmatpush1.bf16.msra.mxu0 %v708
  %731 = vmatprep.subr.bf16.mxu0 0
  %732 = vmatpush1.bf16.msra.mxu0 %v709
  %733 = vmatprep.subr.bf16.mxu0 0
  %734 = vmatpush1.bf16.msra.mxu0 %v710
  %735 = vmatprep.subr.bf16.mxu0 0
  %736 = vmatpush1.bf16.msra.mxu0 0
  %737 = vmatprep.subr.bf16.mxu0 0
  %738 = vmatpush1.bf16.msra.mxu0 0
  %739 = vmatprep.subr.bf16.mxu0 0
  %740 = vmatpush1.bf16.msra.mxu0 0
  %741 = vmatprep.subr.bf16.mxu0 0
  %742 = vmatpush1.bf16.msra.mxu0 0
  %743 = vmatprep.subr.bf16.mxu0 0
  %744 = vmatpush1.bf16.msra.mxu0 0
  %745 = vmatprep.subr.bf16.mxu0 0
  %746 = vmatpush1.bf16.msra.mxu0 0
  %747 = vmatprep.subr.bf16.mxu0 0
  %748 = vmatpush1.bf16.msra.mxu0 0
  %749 = vmatprep.subr.bf16.mxu0 0
  %750 = vmatpush1.bf16.msra.mxu0 0
  %751 = vmatprep.mubr.bf16.mxu0 0
  %752 = vmatmul.mubr.bf16.gmra.mrb[0].mxu0 %v651
  %v753 = vpop.f32.mrb[0].mxu0
  %v754 = vadd.f32 0.0, %v753
  %v755 = vpop.f32.mrb[0].mxu0
  %v756 = vpop.f32.mrb[0].mxu0
  %v757 = vadd.f32 0.0, %v756
  %v758 = vpop.f32.mrb[0].mxu0
  %759 = vmatprep.mubr.bf16.mxu0 0
  %760 = vmatmul.mubr.bf16.gmra.mrb[0].mxu0 %v652
  %v761 = vpop.f32.mrb[0].mxu0
  %v762 = vadd.f32 0.0, %v761
  %v763 = vpop.f32.mrb[0].mxu0
  %v764 = vpop.f32.mrb[0].mxu0
  %v765 = vadd.f32 0.0, %v764
  %v766 = vpop.f32.mrb[0].mxu0
  %767 = vmatprep.mubr.bf16.mxu0 0
  %768 = vmatmul.mubr.bf16.gmra.mrb[0].mxu0 %v653
  %v769 = vpop.f32.mrb[0].mxu0
  %v770 = vadd.f32 0.0, %v769
  %v771 = vpop.f32.mrb[0].mxu0
  %v772 = vpop.f32.mrb[0].mxu0
  %v773 = vadd.f32 0.0, %v772
  %v774 = vpop.f32.mrb[0].mxu0
  %775 = vmatprep.mubr.bf16.mxu0 0
  %776 = vmatmul.mubr.bf16.gmra.mrb[0].mxu0 %v654
  %v777 = vpop.f32.mrb[0].mxu0
  %v778 = vadd.f32 0.0, %v777
  %v779 = vpop.f32.mrb[0].mxu0
  %v780 = vpop.f32.mrb[0].mxu0
  %v781 = vadd.f32 0.0, %v780
  %v782 = vpop.f32.mrb[0].mxu0
  %783 = vdwg.mxu0
  %784 = vst [vmem:[#allocation4] sm:$0xff] %v754
  %785 = vst [vmem:[#allocation4 + $0x8] sm:$0xff] %v757
  %786 = vst [vmem:[#allocation4 + $0x10] sm:$0xff] %v762
  %787 = vst [vmem:[#allocation4 + $0x18] sm:$0xff] %v765
  %788 = vst [vmem:[#allocation4 + $0x20] sm:$0xff] %v770
  %789 = vst [vmem:[#allocation4 + $0x28] sm:$0xff] %v773
  %790 = vst [vmem:[#allocation4 + $0x30] sm:$0xff] %v778
  %791 = vst [vmem:[#allocation4 + $0x38] sm:$0xff] %v781
  %v792 = vld [vmem:[%s5] sm:$0xf]
  %v793 = vld [vmem:[%s5 + $0x4] sm:$0xf]
  %v794 = vld [vmem:[%s5 + $0x8] sm:$0xf]
  %v795 = vld [vmem:[%s5 + $0xc] sm:$0xf]
  %v796 = vld [vmem:[%s5 + $0x10] sm:$0xf]
  %v797 = vld [vmem:[%s5 + $0x14] sm:$0xf]
  %v798 = vld [vmem:[%s5 + $0x18] sm:$0xf]
  %v799 = vld [vmem:[%s5 + $0x1c] sm:$0xf]
  %v800 = vld [vmem:[%s5 + $0x20] sm:$0xf]
  %v801 = vld [vmem:[%s5 + $0x24] sm:$0xf]
  %v802 = vld [vmem:[%s5 + $0x28] sm:$0xf]
  %v803 = vld [vmem:[%s5 + $0x2c] sm:$0xf]
  %v804 = vld [vmem:[%s5 + $0x30] sm:$0xf]
  %v805 = vld [vmem:[%s5 + $0x34] sm:$0xf]
  %v806 = vld [vmem:[%s5 + $0x38] sm:$0xf]
  %v807 = vld [vmem:[%s5 + $0x3c] sm:$0xf]
  %v808 = vld [vmem:[%s6] sm:$0x1]
  %v809 = vld [vmem:[#allocation3] sm:$0xff]
  %v810 = vld [vmem:[#allocation4] sm:$0xff]
  %v812 = vlaneseq
  %v813 = vshrl.u32 %v812, 7
  %v814 = vsub.s32 0, %v813
  %v815 = vrot.slane %v808, %v814
  %v817 = vadd.f32 %v810, %v815
  %v818 = vpack.c.bf16 %v809, %v809
  %v835 = vunpack.c.l.b16 %v792
  %v836 = vunpack.c.l.b16 %v793
  %v837 = vunpack.c.l.b16 %v794
  %v838 = vunpack.c.l.b16 %v795
  %v839 = vunpack.c.l.b16 %v796
  %v840 = vunpack.c.l.b16 %v797
  %v841 = vunpack.c.l.b16 %v798
  %v842 = vunpack.c.l.b16 %v799
  %v843 = vunpack.c.l.b16 %v800
  %v844 = vunpack.c.l.b16 %v801
  %v845 = vunpack.c.l.b16 %v802
  %v846 = vunpack.c.l.b16 %v803
  %v847 = vunpack.c.l.b16 %v804
  %v848 = vunpack.c.l.b16 %v805
  %v849 = vunpack.c.l.b16 %v806
  %v850 = vunpack.c.l.b16 %v807
  %v851 = vpack.c.b16 %v836, %v835
  %v852 = vpack.c.b16 %v838, %v837
  %v853 = vpack.c.b16 %v840, %v839
  %v854 = vpack.c.b16 %v842, %v841
  %v855 = vpack.c.b16 %v844, %v843
  %v856 = vpack.c.b16 %v846, %v845
  %v857 = vpack.c.b16 %v848, %v847
  %v858 = vpack.c.b16 %v850, %v849
  %867 = vmatprep.subr.bf16.mxu0 0
  %868 = vmatpush1.bf16.msra.mxu0 %v851
  %869 = vmatprep.subr.bf16.mxu0 0
  %870 = vmatpush1.bf16.msra.mxu0 %v852
  %871 = vmatprep.subr.bf16.mxu0 0
  %872 = vmatpush1.bf16.msra.mxu0 %v853
  %873 = vmatprep.subr.bf16.mxu0 0
  %874 = vmatpush1.bf16.msra.mxu0 %v854
  %875 = vmatprep.subr.bf16.mxu0 0
  %876 = vmatpush1.bf16.msra.mxu0 %v855
  %877 = vmatprep.subr.bf16.mxu0 0
  %878 = vmatpush1.bf16.msra.mxu0 %v856
  %879 = vmatprep.subr.bf16.mxu0 0
  %880 = vmatpush1.bf16.msra.mxu0 %v857
  %881 = vmatprep.subr.bf16.mxu0 0
  %882 = vmatpush1.bf16.msra.mxu0 %v858
  %883 = vmatprep.subr.bf16.mxu0 0
  %884 = vmatpush1.bf16.msra.mxu0 0
  %885 = vmatprep.subr.bf16.mxu0 0
  %886 = vmatpush1.bf16.msra.mxu0 0
  %887 = vmatprep.subr.bf16.mxu0 0
  %888 = vmatpush1.bf16.msra.mxu0 0
  %889 = vmatprep.subr.bf16.mxu0 0
  %890 = vmatpush1.bf16.msra.mxu0 0
  %891 = vmatprep.subr.bf16.mxu0 0
  %892 = vmatpush1.bf16.msra.mxu0 0
  %893 = vmatprep.subr.bf16.mxu0 0
  %894 = vmatpush1.bf16.msra.mxu0 0
  %895 = vmatprep.subr.bf16.mxu0 0
  %896 = vmatpush1.bf16.msra.mxu0 0
  %897 = vmatprep.subr.bf16.mxu0 0
  %898 = vmatpush1.bf16.msra.mxu0 0
  %899 = vmatprep.mubr.bf16.mxu0 0
  %900 = vmatmul.mubr.bf16.gmra.mrb[0].mxu0 %v818
  %v901 = vpop.f32.mrb[0].mxu0
  %v902 = vadd.f32 0.0, %v901
  %v903 = vpop.f32.mrb[0].mxu0
  %v904 = vpop.f32.mrb[0].mxu0
  %v905 = vpop.f32.mrb[0].mxu0
  %906 = vdwg.mxu0
  %v907 = vadd.f32 %v817, %v902
  %v908 = vmax.f32 %v907, 0.0
  %v909 = vpack.c.bf16 %v908, %v908
  %v912 = vunpack.c.l.s4 1966171168
  %v913 = vunpack.c.0.s8 %v912
  %v914 = vlaneseq
  %v915 = vshrl.u32 %v914, 7
  %v916 = vsub.s32 %v913, %v915
  %v917 = vrot.slane %v909, %v916
  %v918 = vcombine.high %v917, %v917
  %v920 = vunpack.c.l.s4 1966171168
  %v921 = vunpack.c.0.s8 %v920
  %v922 = vlaneseq
  %v923 = vshrl.u32 %v922, 7
  %v924 = vsub.s32 %v921, %v923
  %v925 = vrot.slane %v917, %v924
  %v927 = vunpack.c.l.s4 1966171168
  %v928 = vunpack.c.0.s8 %v927
  %v929 = vlaneseq
  %v930 = vshrl.u32 %v929, 7
  %v931 = vsub.s32 %v928, %v930
  %v932 = vrot.slane %v918, %v931
  %v933 = vcombine.high %v925, %v925
  %v934 = vcombine.high %v932, %v932
  %v935 = vunpack.i.l.s16 %v925
  %v936 = vunpack.i.h.s16 %v925
  %v937 = vunpack.i.l.s16 %v932
  %v938 = vunpack.i.h.s16 %v932
  %v939 = vunpack.i.l.s16 %v933
  %v940 = vunpack.i.h.s16 %v933
  %v941 = vunpack.i.l.s16 %v934
  %v942 = vunpack.i.h.s16 %v934
  %v943 = vpack.i.b16 %v935, %v935
  %v944 = vpack.i.b16 %v936, %v936
  %v945 = vpack.i.b16 %v937, %v937
  %v946 = vpack.i.b16 %v938, %v938
  %v947 = vpack.i.b16 %v939, %v939
  %v948 = vpack.i.b16 %v940, %v940
  %v949 = vpack.i.b16 %v941, %v941
  %v950 = vpack.i.b16 %v942, %v942
  %v952 = vunpack.c.l.s4 286326784
  %v953 = vunpack.c.0.s8 %v952
  %v954 = vlaneseq
  %v955 = vshrl.u32 %v954, 7
  %v956 = vsub.s32 %v953, %v955
  %v957 = vrot.slane %v943, %v956
  %v959 = vunpack.c.l.s4 286326784
  %v960 = vunpack.c.0.s8 %v959
  %v961 = vlaneseq
  %v962 = vshrl.u32 %v961, 7
  %v963 = vsub.s32 %v960, %v962
  %v964 = vrot.slane %v944, %v963
  %v966 = vunpack.c.l.s4 286326784
  %v967 = vunpack.c.0.s8 %v966
  %v968 = vlaneseq
  %v969 = vshrl.u32 %v968, 7
  %v970 = vsub.s32 %v967, %v969
  %v971 = vrot.slane %v945, %v970
  %v973 = vunpack.c.l.s4 286326784
  %v974 = vunpack.c.0.s8 %v973
  %v975 = vlaneseq
  %v976 = vshrl.u32 %v975, 7
  %v977 = vsub.s32 %v974, %v976
  %v978 = vrot.slane %v946, %v977
  %v980 = vunpack.c.l.s4 286326784
  %v981 = vunpack.c.0.s8 %v980
  %v982 = vlaneseq
  %v983 = vshrl.u32 %v982, 7
  %v984 = vsub.s32 %v981, %v983
  %v985 = vrot.slane %v947, %v984
  %v987 = vunpack.c.l.s4 286326784
  %v988 = vunpack.c.0.s8 %v987
  %v989 = vlaneseq
  %v990 = vshrl.u32 %v989, 7
  %v991 = vsub.s32 %v988, %v990
  %v992 = vrot.slane %v948, %v991
  %v994 = vunpack.c.l.s4 286326784
  %v995 = vunpack.c.0.s8 %v994
  %v996 = vlaneseq
  %v997 = vshrl.u32 %v996, 7
  %v998 = vsub.s32 %v995, %v997
  %v999 = vrot.slane %v949, %v998
  %v1001 = vunpack.c.l.s4 286326784
  %v1002 = vunpack.c.0.s8 %v1001
  %v1003 = vlaneseq
  %v1004 = vshrl.u32 %v1003, 7
  %v1005 = vsub.s32 %v1002, %v1004
  %v1006 = vrot.slane %v950, %v1005
  %vm1015 = vcmask 1040384
  %vm1016 = vsmask.f32 256
  %vm1017 = vmand %vm1015, %vm1016
  %v1018 = vld [vmem:[%s7] sm:$0x1]
  %v1019 = vsel %vm1017, %v957, %v1018
  %1020 = vst [vmem:[%s7] sm:$0x1] %v1019
  %v1021 = vld [vmem:[%s7 + $0x4] sm:$0x1]
  %v1022 = vsel %vm1017, %v964, %v1021
  %1023 = vst [vmem:[%s7 + $0x4] sm:$0x1] %v1022
  %v1024 = vld [vmem:[%s7 + $0x8] sm:$0x1]
  %v1025 = vsel %vm1017, %v971, %v1024
  %1026 = vst [vmem:[%s7 + $0x8] sm:$0x1] %v1025
  %v1027 = vld [vmem:[%s7 + $0xc] sm:$0x1]
  %v1028 = vsel %vm1017, %v978, %v1027
  %1029 = vst [vmem:[%s7 + $0xc] sm:$0x1] %v1028
  %v1030 = vld [vmem:[%s7 + $0x10] sm:$0x1]
  %v1031 = vsel %vm1017, %v985, %v1030
  %1032 = vst [vmem:[%s7 + $0x10] sm:$0x1] %v1031
  %v1033 = vld [vmem:[%s7 + $0x14] sm:$0x1]
  %v1034 = vsel %vm1017, %v992, %v1033
  %1035 = vst [vmem:[%s7 + $0x14] sm:$0x1] %v1034
  %v1036 = vld [vmem:[%s7 + $0x18] sm:$0x1]
  %v1037 = vsel %vm1017, %v999, %v1036
  %1038 = vst [vmem:[%s7 + $0x18] sm:$0x1] %v1037
  %v1039 = vld [vmem:[%s7 + $0x1c] sm:$0x1]
  %v1040 = vsel %vm1017, %v1006, %v1039
  %1041 = vst [vmem:[%s7 + $0x1c] sm:$0x1] %v1040
  %v1042 = vld [vmem:[#allocation4 + $0x8] sm:$0xff]
  %v1043 = vadd.f32 %v1042, %v815
  %1044 = vmatprep.subr.bf16.mxu0 0
  %1045 = vmatpush1.bf16.msra.mxu0 %v851
  %1046 = vmatprep.subr.bf16.mxu0 0
  %1047 = vmatpush1.bf16.msra.mxu0 %v852
  %1048 = vmatprep.subr.bf16.mxu0 0
  %1049 = vmatpush1.bf16.msra.mxu0 %v853
  %1050 = vmatprep.subr.bf16.mxu0 0
  %1051 = vmatpush1.bf16.msra.mxu0 %v854
  %1052 = vmatprep.subr.bf16.mxu0 0
  %1053 = vmatpush1.bf16.msra.mxu0 %v855
  %1054 = vmatprep.subr.bf16.mxu0 0
  %1055 = vmatpush1.bf16.msra.mxu0 %v856
  %1056 = vmatprep.subr.bf16.mxu0 0
  %1057 = vmatpush1.bf16.msra.mxu0 %v857
  %1058 = vmatprep.subr.bf16.mxu0 0
  %1059 = vmatpush1.bf16.msra.mxu0 %v858
  %1060 = vmatprep.subr.bf16.mxu0 0
  %1061 = vmatpush1.bf16.msra.mxu0 0
  %1062 = vmatprep.subr.bf16.mxu0 0
  %1063 = vmatpush1.bf16.msra.mxu0 0
  %1064 = vmatprep.subr.bf16.mxu0 0
  %1065 = vmatpush1.bf16.msra.mxu0 0
  %1066 = vmatprep.subr.bf16.mxu0 0
  %1067 = vmatpush1.bf16.msra.mxu0 0
  %1068 = vmatprep.subr.bf16.mxu0 0
  %1069 = vmatpush1.bf16.msra.mxu0 0
  %1070 = vmatprep.subr.bf16.mxu0 0
  %1071 = vmatpush1.bf16.msra.mxu0 0
  %1072 = vmatprep.subr.bf16.mxu0 0
  %1073 = vmatpush1.bf16.msra.mxu0 0
  %1074 = vmatprep.subr.bf16.mxu0 0
  %1075 = vmatpush1.bf16.msra.mxu0 0
  %1076 = vmatprep.mubr.bf16.mxu0 0
  %1077 = vmatmul.mubr.bf16.gmra.mrb[0].mxu0 %v909
  %v1078 = vpop.f32.mrb[0].mxu0
  %v1079 = vadd.f32 0.0, %v1078
  %v1080 = vpop.f32.mrb[0].mxu0
  %v1081 = vpop.f32.mrb[0].mxu0
  %v1082 = vpop.f32.mrb[0].mxu0
  %1083 = vdwg.mxu0
  %v1084 = vadd.f32 %v1043, %v1079
  %v1085 = vmax.f32 %v1084, 0.0
  %v1086 = vpack.c.bf16 %v1085, %v1085
  %v1089 = vunpack.c.l.s4 1966171168
  %v1090 = vunpack.c.0.s8 %v1089
  %v1091 = vlaneseq
  %v1092 = vshrl.u32 %v1091, 7
  %v1093 = vsub.s32 %v1090, %v1092
  %v1094 = vrot.slane %v1086, %v1093
  %v1095 = vcombine.high %v1094, %v1094
  %v1097 = vunpack.c.l.s4 1966171168
  %v1098 = vunpack.c.0.s8 %v1097
  %v1099 = vlaneseq
  %v1100 = vshrl.u32 %v1099, 7
  %v1101 = vsub.s32 %v1098, %v1100
  %v1102 = vrot.slane %v1094, %v1101
  %v1104 = vunpack.c.l.s4 1966171168
  %v1105 = vunpack.c.0.s8 %v1104
  %v1106 = vlaneseq
  %v1107 = vshrl.u32 %v1106, 7
  %v1108 = vsub.s32 %v1105, %v1107
  %v1109 = vrot.slane %v1095, %v1108
  %v1110 = vcombine.high %v1102, %v1102
  %v1111 = vcombine.high %v1109, %v1109
  %v1112 = vunpack.i.l.s16 %v1102
  %v1113 = vunpack.i.h.s16 %v1102
  %v1114 = vunpack.i.l.s16 %v1109
  %v1115 = vunpack.i.h.s16 %v1109
  %v1116 = vunpack.i.l.s16 %v1110
  %v1117 = vunpack.i.h.s16 %v1110
  %v1118 = vunpack.i.l.s16 %v1111
  %v1119 = vunpack.i.h.s16 %v1111
  %v1120 = vpack.i.b16 %v1112, %v1112
  %v1121 = vpack.i.b16 %v1113, %v1113
  %v1122 = vpack.i.b16 %v1114, %v1114
  %v1123 = vpack.i.b16 %v1115, %v1115
  %v1124 = vpack.i.b16 %v1116, %v1116
  %v1125 = vpack.i.b16 %v1117, %v1117
  %v1126 = vpack.i.b16 %v1118, %v1118
  %v1127 = vpack.i.b16 %v1119, %v1119
  %v1129 = vunpack.c.l.s4 286326784
  %v1130 = vunpack.c.0.s8 %v1129
  %v1131 = vlaneseq
  %v1132 = vshrl.u32 %v1131, 7
  %v1133 = vsub.s32 %v1130, %v1132
  %v1134 = vrot.slane %v1120, %v1133
  %v1136 = vunpack.c.l.s4 286326784
  %v1137 = vunpack.c.0.s8 %v1136
  %v1138 = vlaneseq
  %v1139 = vshrl.u32 %v1138, 7
  %v1140 = vsub.s32 %v1137, %v1139
  %v1141 = vrot.slane %v1121, %v1140
  %v1143 = vunpack.c.l.s4 286326784
  %v1144 = vunpack.c.0.s8 %v1143
  %v1145 = vlaneseq
  %v1146 = vshrl.u32 %v1145, 7
  %v1147 = vsub.s32 %v1144, %v1146
  %v1148 = vrot.slane %v1122, %v1147
  %v1150 = vunpack.c.l.s4 286326784
  %v1151 = vunpack.c.0.s8 %v1150
  %v1152 = vlaneseq
  %v1153 = vshrl.u32 %v1152, 7
  %v1154 = vsub.s32 %v1151, %v1153
  %v1155 = vrot.slane %v1123, %v1154
  %v1157 = vunpack.c.l.s4 286326784
  %v1158 = vunpack.c.0.s8 %v1157
  %v1159 = vlaneseq
  %v1160 = vshrl.u32 %v1159, 7
  %v1161 = vsub.s32 %v1158, %v1160
  %v1162 = vrot.slane %v1124, %v1161
  %v1164 = vunpack.c.l.s4 286326784
  %v1165 = vunpack.c.0.s8 %v1164
  %v1166 = vlaneseq
  %v1167 = vshrl.u32 %v1166, 7
  %v1168 = vsub.s32 %v1165, %v1167
  %v1169 = vrot.slane %v1125, %v1168
  %v1171 = vunpack.c.l.s4 286326784
  %v1172 = vunpack.c.0.s8 %v1171
  %v1173 = vlaneseq
  %v1174 = vshrl.u32 %v1173, 7
  %v1175 = vsub.s32 %v1172, %v1174
  %v1176 = vrot.slane %v1126, %v1175
  %v1178 = vunpack.c.l.s4 286326784
  %v1179 = vunpack.c.0.s8 %v1178
  %v1180 = vlaneseq
  %v1181 = vshrl.u32 %v1180, 7
  %v1182 = vsub.s32 %v1179, %v1181
  %v1183 = vrot.slane %v1127, %v1182
  %vm1192 = vsmask.f32 7938
  %vm1193 = vmand %vm1015, %vm1192
  %v1194 = vld [vmem:[%s7] sm:$0x1]
  %v1195 = vsel %vm1193, %v1134, %v1194
  %1196 = vst [vmem:[%s7] sm:$0x1] %v1195
  %v1197 = vld [vmem:[%s7 + $0x4] sm:$0x1]
  %v1198 = vsel %vm1193, %v1141, %v1197
  %1199 = vst [vmem:[%s7 + $0x4] sm:$0x1] %v1198
  %v1200 = vld [vmem:[%s7 + $0x8] sm:$0x1]
  %v1201 = vsel %vm1193, %v1148, %v1200
  %1202 = vst [vmem:[%s7 + $0x8] sm:$0x1] %v1201
  %v1203 = vld [vmem:[%s7 + $0xc] sm:$0x1]
  %v1204 = vsel %vm1193, %v1155, %v1203
  %1205 = vst [vmem:[%s7 + $0xc] sm:$0x1] %v1204
  %v1206 = vld [vmem:[%s7 + $0x10] sm:$0x1]
  %v1207 = vsel %vm1193, %v1162, %v1206
  %1208 = vst [vmem:[%s7 + $0x10] sm:$0x1] %v1207
  %v1209 = vld [vmem:[%s7 + $0x14] sm:$0x1]
  %v1210 = vsel %vm1193, %v1169, %v1209
  %1211 = vst [vmem:[%s7 + $0x14] sm:$0x1] %v1210
  %v1212 = vld [vmem:[%s7 + $0x18] sm:$0x1]
  %v1213 = vsel %vm1193, %v1176, %v1212
  %1214 = vst [vmem:[%s7 + $0x18] sm:$0x1] %v1213
  %v1215 = vld [vmem:[%s7 + $0x1c] sm:$0x1]
  %v1216 = vsel %vm1193, %v1183, %v1215
  %1217 = vst [vmem:[%s7 + $0x1c] sm:$0x1] %v1216
  %v1218 = vld [vmem:[#allocation4 + $0x10] sm:$0xff]
  %v1219 = vadd.f32 %v1218, %v815
  %1220 = vmatprep.subr.bf16.mxu0 0
  %1221 = vmatpush1.bf16.msra.mxu0 %v851
  %1222 = vmatprep.subr.bf16.mxu0 0
  %1223 = vmatpush1.bf16.msra.mxu0 %v852
  %1224 = vmatprep.subr.bf16.mxu0 0
  %1225 = vmatpush1.bf16.msra.mxu0 %v853
  %1226 = vmatprep.subr.bf16.mxu0 0
  %1227 = vmatpush1.bf16.msra.mxu0 %v854
  %1228 = vmatprep.subr.bf16.mxu0 0
  %1229 = vmatpush1.bf16.msra.mxu0 %v855
  %1230 = vmatprep.subr.bf16.mxu0 0
  %1231 = vmatpush1.bf16.msra.mxu0 %v856
  %1232 = vmatprep.subr.bf16.mxu0 0
  %1233 = vmatpush1.bf16.msra.mxu0 %v857
  %1234 = vmatprep.subr.bf16.mxu0 0
  %1235 = vmatpush1.bf16.msra.mxu0 %v858
  %1236 = vmatprep.subr.bf16.mxu0 0
  %1237 = vmatpush1.bf16.msra.mxu0 0
  %1238 = vmatprep.subr.bf16.mxu0 0
  %1239 = vmatpush1.bf16.msra.mxu0 0
  %1240 = vmatprep.subr.bf16.mxu0 0
  %1241 = vmatpush1.bf16.msra.mxu0 0
  %1242 = vmatprep.subr.bf16.mxu0 0
  %1243 = vmatpush1.bf16.msra.mxu0 0
  %1244 = vmatprep.subr.bf16.mxu0 0
  %1245 = vmatpush1.bf16.msra.mxu0 0
  %1246 = vmatprep.subr.bf16.mxu0 0
  %1247 = vmatpush1.bf16.msra.mxu0 0
  %1248 = vmatprep.subr.bf16.mxu0 0
  %1249 = vmatpush1.bf16.msra.mxu0 0
  %1250 = vmatprep.subr.bf16.mxu0 0
  %1251 = vmatpush1.bf16.msra.mxu0 0
  %1252 = vmatprep.mubr.bf16.mxu0 0
  %1253 = vmatmul.mubr.bf16.gmra.mrb[0].mxu0 %v1086
  %v1254 = vpop.f32.mrb[0].mxu0
  %v1255 = vadd.f32 0.0, %v1254
  %v1256 = vpop.f32.mrb[0].mxu0
  %v1257 = vpop.f32.mrb[0].mxu0
  %v1258 = vpop.f32.mrb[0].mxu0
  %1259 = vdwg.mxu0
  %v1260 = vadd.f32 %v1219, %v1255
  %v1261 = vmax.f32 %v1260, 0.0
  %v1262 = vpack.c.bf16 %v1261, %v1261
  %v1265 = vunpack.c.l.s4 1966171168
  %v1266 = vunpack.c.0.s8 %v1265
  %v1267 = vlaneseq
  %v1268 = vshrl.u32 %v1267, 7
  %v1269 = vsub.s32 %v1266, %v1268
  %v1270 = vrot.slane %v1262, %v1269
  %v1271 = vcombine.high %v1270, %v1270
  %v1273 = vunpack.c.l.s4 1966171168
  %v1274 = vunpack.c.0.s8 %v1273
  %v1275 = vlaneseq
  %v1276 = vshrl.u32 %v1275, 7
  %v1277 = vsub.s32 %v1274, %v1276
  %v1278 = vrot.slane %v1270, %v1277
  %v1280 = vunpack.c.l.s4 1966171168
  %v1281 = vunpack.c.0.s8 %v1280
  %v1282 = vlaneseq
  %v1283 = vshrl.u32 %v1282, 7
  %v1284 = vsub.s32 %v1281, %v1283
  %v1285 = vrot.slane %v1271, %v1284
  %v1286 = vcombine.high %v1278, %v1278
  %v1287 = vcombine.high %v1285, %v1285
  %v1288 = vunpack.i.l.s16 %v1278
  %v1289 = vunpack.i.h.s16 %v1278
  %v1290 = vunpack.i.l.s16 %v1285
  %v1291 = vunpack.i.h.s16 %v1285
  %v1292 = vunpack.i.l.s16 %v1286
  %v1293 = vunpack.i.h.s16 %v1286
  %v1294 = vunpack.i.l.s16 %v1287
  %v1295 = vunpack.i.h.s16 %v1287
  %v1296 = vpack.i.b16 %v1288, %v1288
  %v1297 = vpack.i.b16 %v1289, %v1289
  %v1298 = vpack.i.b16 %v1290, %v1290
  %v1299 = vpack.i.b16 %v1291, %v1291
  %v1300 = vpack.i.b16 %v1292, %v1292
  %v1301 = vpack.i.b16 %v1293, %v1293
  %v1302 = vpack.i.b16 %v1294, %v1294
  %v1303 = vpack.i.b16 %v1295, %v1295
  %v1305 = vunpack.c.l.s4 286326784
  %v1306 = vunpack.c.0.s8 %v1305
  %v1307 = vlaneseq
  %v1308 = vshrl.u32 %v1307, 7
  %v1309 = vsub.s32 %v1306, %v1308
  %v1310 = vrot.slane %v1296, %v1309
  %v1312 = vunpack.c.l.s4 286326784
  %v1313 = vunpack.c.0.s8 %v1312
  %v1314 = vlaneseq
  %v1315 = vshrl.u32 %v1314, 7
  %v1316 = vsub.s32 %v1313, %v1315
  %v1317 = vrot.slane %v1297, %v1316
  %v1319 = vunpack.c.l.s4 286326784
  %v1320 = vunpack.c.0.s8 %v1319
  %v1321 = vlaneseq
  %v1322 = vshrl.u32 %v1321, 7
  %v1323 = vsub.s32 %v1320, %v1322
  %v1324 = vrot.slane %v1298, %v1323
  %v1326 = vunpack.c.l.s4 286326784
  %v1327 = vunpack.c.0.s8 %v1326
  %v1328 = vlaneseq
  %v1329 = vshrl.u32 %v1328, 7
  %v1330 = vsub.s32 %v1327, %v1329
  %v1331 = vrot.slane %v1299, %v1330
  %v1333 = vunpack.c.l.s4 286326784
  %v1334 = vunpack.c.0.s8 %v1333
  %v1335 = vlaneseq
  %v1336 = vshrl.u32 %v1335, 7
  %v1337 = vsub.s32 %v1334, %v1336
  %v1338 = vrot.slane %v1300, %v1337
  %v1340 = vunpack.c.l.s4 286326784
  %v1341 = vunpack.c.0.s8 %v1340
  %v1342 = vlaneseq
  %v1343 = vshrl.u32 %v1342, 7
  %v1344 = vsub.s32 %v1341, %v1343
  %v1345 = vrot.slane %v1301, %v1344
  %v1347 = vunpack.c.l.s4 286326784
  %v1348 = vunpack.c.0.s8 %v1347
  %v1349 = vlaneseq
  %v1350 = vshrl.u32 %v1349, 7
  %v1351 = vsub.s32 %v1348, %v1350
  %v1352 = vrot.slane %v1302, %v1351
  %v1354 = vunpack.c.l.s4 286326784
  %v1355 = vunpack.c.0.s8 %v1354
  %v1356 = vlaneseq
  %v1357 = vshrl.u32 %v1356, 7
  %v1358 = vsub.s32 %v1355, %v1357
  %v1359 = vrot.slane %v1303, %v1358
  %vm1368 = vcmask 1041409
  %vm1369 = vsmask.f32 1280
  %vm1370 = vmand %vm1368, %vm1369
  %v1371 = vld [vmem:[%s7] sm:$0x2]
  %v1372 = vsel %vm1370, %v1310, %v1371
  %1373 = vst [vmem:[%s7] sm:$0x2] %v1372
  %v1374 = vld [vmem:[%s7 + $0x4] sm:$0x2]
  %v1375 = vsel %vm1370, %v1317, %v1374
  %1376 = vst [vmem:[%s7 + $0x4] sm:$0x2] %v1375
  %v1377 = vld [vmem:[%s7 + $0x8] sm:$0x2]
  %v1378 = vsel %vm1370, %v1324, %v1377
  %1379 = vst [vmem:[%s7 + $0x8] sm:$0x2] %v1378
  %v1380 = vld [vmem:[%s7 + $0xc] sm:$0x2]
  %v1381 = vsel %vm1370, %v1331, %v1380
  %1382 = vst [vmem:[%s7 + $0xc] sm:$0x2] %v1381
  %v1383 = vld [vmem:[%s7 + $0x10] sm:$0x2]
  %v1384 = vsel %vm1370, %v1338, %v1383
  %1385 = vst [vmem:[%s7 + $0x10] sm:$0x2] %v1384
  %v1386 = vld [vmem:[%s7 + $0x14] sm:$0x2]
  %v1387 = vsel %vm1370, %v1345, %v1386
  %1388 = vst [vmem:[%s7 + $0x14] sm:$0x2] %v1387
  %v1389 = vld [vmem:[%s7 + $0x18] sm:$0x2]
  %v1390 = vsel %vm1370, %v1352, %v1389
  %1391 = vst [vmem:[%s7 + $0x18] sm:$0x2] %v1390
  %v1392 = vld [vmem:[%s7 + $0x1c] sm:$0x2]
  %v1393 = vsel %vm1370, %v1359, %v1392
  %1394 = vst [vmem:[%s7 + $0x1c] sm:$0x2] %v1393
  %v1395 = vld [vmem:[#allocation4 + $0x18] sm:$0xff]
  %v1396 = vadd.f32 %v1395, %v815
  %1397 = vmatprep.subr.bf16.mxu0 0
  %1398 = vmatpush1.bf16.msra.mxu0 %v851
  %1399 = vmatprep.subr.bf16.mxu0 0
  %1400 = vmatpush1.bf16.msra.mxu0 %v852
  %1401 = vmatprep.subr.bf16.mxu0 0
  %1402 = vmatpush1.bf16.msra.mxu0 %v853
  %1403 = vmatprep.subr.bf16.mxu0 0
  %1404 = vmatpush1.bf16.msra.mxu0 %v854
  %1405 = vmatprep.subr.bf16.mxu0 0
  %1406 = vmatpush1.bf16.msra.mxu0 %v855
  %1407 = vmatprep.subr.bf16.mxu0 0
  %1408 = vmatpush1.bf16.msra.mxu0 %v856
  %1409 = vmatprep.subr.bf16.mxu0 0
  %1410 = vmatpush1.bf16.msra.mxu0 %v857
  %1411 = vmatprep.subr.bf16.mxu0 0
  %1412 = vmatpush1.bf16.msra.mxu0 %v858
  %1413 = vmatprep.subr.bf16.mxu0 0
  %1414 = vmatpush1.bf16.msra.mxu0 0
  %1415 = vmatprep.subr.bf16.mxu0 0
  %1416 = vmatpush1.bf16.msra.mxu0 0
  %1417 = vmatprep.subr.bf16.mxu0 0
  %1418 = vmatpush1.bf16.msra.mxu0 0
  %1419 = vmatprep.subr.bf16.mxu0 0
  %1420 = vmatpush1.bf16.msra.mxu0 0
  %1421 = vmatprep.subr.bf16.mxu0 0
  %1422 = vmatpush1.bf16.msra.mxu0 0
  %1423 = vmatprep.subr.bf16.mxu0 0
  %1424 = vmatpush1.bf16.msra.mxu0 0
  %1425 = vmatprep.subr.bf16.mxu0 0
  %1426 = vmatpush1.bf16.msra.mxu0 0
  %1427 = vmatprep.subr.bf16.mxu0 0
  %1428 = vmatpush1.bf16.msra.mxu0 0
  %1429 = vmatprep.mubr.bf16.mxu0 0
  %1430 = vmatmul.mubr.bf16.gmra.mrb[0].mxu0 %v1262
  %v1431 = vpop.f32.mrb[0].mxu0
  %v1432 = vadd.f32 0.0, %v1431
  %v1433 = vpop.f32.mrb[0].mxu0
  %v1434 = vpop.f32.mrb[0].mxu0
  %v1435 = vpop.f32.mrb[0].mxu0
  %1436 = vdwg.mxu0
  %v1437 = vadd.f32 %v1396, %v1432
  %v1438 = vmax.f32 %v1437, 0.0
  %v1439 = vpack.c.bf16 %v1438, %v1438
  %v1442 = vunpack.c.l.s4 1966171168
  %v1443 = vunpack.c.0.s8 %v1442
  %v1444 = vlaneseq
  %v1445 = vshrl.u32 %v1444, 7
  %v1446 = vsub.s32 %v1443, %v1445
  %v1447 = vrot.slane %v1439, %v1446
  %v1448 = vcombine.high %v1447, %v1447
  %v1450 = vunpack.c.l.s4 1966171168
  %v1451 = vunpack.c.0.s8 %v1450
  %v1452 = vlaneseq
  %v1453 = vshrl.u32 %v1452, 7
  %v1454 = vsub.s32 %v1451, %v1453
  %v1455 = vrot.slane %v1447, %v1454
  %v1457 = vunpack.c.l.s4 1966171168
  %v1458 = vunpack.c.0.s8 %v1457
  %v1459 = vlaneseq
  %v1460 = vshrl.u32 %v1459, 7
  %v1461 = vsub.s32 %v1458, %v1460
  %v1462 = vrot.slane %v1448, %v1461
  %v1463 = vcombine.high %v1455, %v1455
  %v1464 = vcombine.high %v1462, %v1462
  %v1465 = vunpack.i.l.s16 %v1455
  %v1466 = vunpack.i.h.s16 %v1455
  %v1467 = vunpack.i.l.s16 %v1462
  %v1468 = vunpack.i.h.s16 %v1462
  %v1469 = vunpack.i.l.s16 %v1463
  %v1470 = vunpack.i.h.s16 %v1463
  %v1471 = vunpack.i.l.s16 %v1464
  %v1472 = vunpack.i.h.s16 %v1464
  %v1473 = vpack.i.b16 %v1465, %v1465
  %v1474 = vpack.i.b16 %v1466, %v1466
  %v1475 = vpack.i.b16 %v1467, %v1467
  %v1476 = vpack.i.b16 %v1468, %v1468
  %v1477 = vpack.i.b16 %v1469, %v1469
  %v1478 = vpack.i.b16 %v1470, %v1470
  %v1479 = vpack.i.b16 %v1471, %v1471
  %v1480 = vpack.i.b16 %v1472, %v1472
  %v1482 = vunpack.c.l.s4 286326784
  %v1483 = vunpack.c.0.s8 %v1482
  %v1484 = vlaneseq
  %v1485 = vshrl.u32 %v1484, 7
  %v1486 = vsub.s32 %v1483, %v1485
  %v1487 = vrot.slane %v1473, %v1486
  %v1489 = vunpack.c.l.s4 286326784
  %v1490 = vunpack.c.0.s8 %v1489
  %v1491 = vlaneseq
  %v1492 = vshrl.u32 %v1491, 7
  %v1493 = vsub.s32 %v1490, %v1492
  %v1494 = vrot.slane %v1474, %v1493
  %v1496 = vunpack.c.l.s4 286326784
  %v1497 = vunpack.c.0.s8 %v1496
  %v1498 = vlaneseq
  %v1499 = vshrl.u32 %v1498, 7
  %v1500 = vsub.s32 %v1497, %v1499
  %v1501 = vrot.slane %v1475, %v1500
  %v1503 = vunpack.c.l.s4 286326784
  %v1504 = vunpack.c.0.s8 %v1503
  %v1505 = vlaneseq
  %v1506 = vshrl.u32 %v1505, 7
  %v1507 = vsub.s32 %v1504, %v1506
  %v1508 = vrot.slane %v1476, %v1507
  %v1510 = vunpack.c.l.s4 286326784
  %v1511 = vunpack.c.0.s8 %v1510
  %v1512 = vlaneseq
  %v1513 = vshrl.u32 %v1512, 7
  %v1514 = vsub.s32 %v1511, %v1513
  %v1515 = vrot.slane %v1477, %v1514
  %v1517 = vunpack.c.l.s4 286326784
  %v1518 = vunpack.c.0.s8 %v1517
  %v1519 = vlaneseq
  %v1520 = vshrl.u32 %v1519, 7
  %v1521 = vsub.s32 %v1518, %v1520
  %v1522 = vrot.slane %v1478, %v1521
  %v1524 = vunpack.c.l.s4 286326784
  %v1525 = vunpack.c.0.s8 %v1524
  %v1526 = vlaneseq
  %v1527 = vshrl.u32 %v1526, 7
  %v1528 = vsub.s32 %v1525, %v1527
  %v1529 = vrot.slane %v1479, %v1528
  %v1531 = vunpack.c.l.s4 286326784
  %v1532 = vunpack.c.0.s8 %v1531
  %v1533 = vlaneseq
  %v1534 = vshrl.u32 %v1533, 7
  %v1535 = vsub.s32 %v1532, %v1534
  %v1536 = vrot.slane %v1480, %v1535
  %vm1545 = vsmask.f32 7942
  %vm1546 = vmand %vm1368, %vm1545
  %v1547 = vld [vmem:[%s7] sm:$0x2]
  %v1548 = vsel %vm1546, %v1487, %v1547
  %1549 = vst [vmem:[%s7] sm:$0x2] %v1548
  %v1550 = vld [vmem:[%s7 + $0x4] sm:$0x2]
  %v1551 = vsel %vm1546, %v1494, %v1550
  %1552 = vst [vmem:[%s7 + $0x4] sm:$0x2] %v1551
  %v1553 = vld [vmem:[%s7 + $0x8] sm:$0x2]
  %v1554 = vsel %vm1546, %v1501, %v1553
  %1555 = vst [vmem:[%s7 + $0x8] sm:$0x2] %v1554
  %v1556 = vld [vmem:[%s7 + $0xc] sm:$0x2]
  %v1557 = vsel %vm1546, %v1508, %v1556
  %1558 = vst [vmem:[%s7 + $0xc] sm:$0x2] %v1557
  %v1559 = vld [vmem:[%s7 + $0x10] sm:$0x2]
  %v1560 = vsel %vm1546, %v1515, %v1559
  %1561 = vst [vmem:[%s7 + $0x10] sm:$0x2] %v1560
  %v1562 = vld [vmem:[%s7 + $0x14] sm:$0x2]
  %v1563 = vsel %vm1546, %v1522, %v1562
  %1564 = vst [vmem:[%s7 + $0x14] sm:$0x2] %v1563
  %v1565 = vld [vmem:[%s7 + $0x18] sm:$0x2]
  %v1566 = vsel %vm1546, %v1529, %v1565
  %1567 = vst [vmem:[%s7 + $0x18] sm:$0x2] %v1566
  %v1568 = vld [vmem:[%s7 + $0x1c] sm:$0x2]
  %v1569 = vsel %vm1546, %v1536, %v1568
  %1570 = vst [vmem:[%s7 + $0x1c] sm:$0x2] %v1569
  %v1571 = vld [vmem:[#allocation4 + $0x20] sm:$0xff]
  %v1572 = vadd.f32 %v1571, %v815
  %1573 = vmatprep.subr.bf16.mxu0 0
  %1574 = vmatpush1.bf16.msra.mxu0 %v851
  %1575 = vmatprep.subr.bf16.mxu0 0
  %1576 = vmatpush1.bf16.msra.mxu0 %v852
  %1577 = vmatprep.subr.bf16.mxu0 0
  %1578 = vmatpush1.bf16.msra.mxu0 %v853
  %1579 = vmatprep.subr.bf16.mxu0 0
  %1580 = vmatpush1.bf16.msra.mxu0 %v854
  %1581 = vmatprep.subr.bf16.mxu0 0
  %1582 = vmatpush1.bf16.msra.mxu0 %v855
  %1583 = vmatprep.subr.bf16.mxu0 0
  %1584 = vmatpush1.bf16.msra.mxu0 %v856
  %1585 = vmatprep.subr.bf16.mxu0 0
  %1586 = vmatpush1.bf16.msra.mxu0 %v857
  %1587 = vmatprep.subr.bf16.mxu0 0
  %1588 = vmatpush1.bf16.msra.mxu0 %v858
  %1589 = vmatprep.subr.bf16.mxu0 0
  %1590 = vmatpush1.bf16.msra.mxu0 0
  %1591 = vmatprep.subr.bf16.mxu0 0
  %1592 = vmatpush1.bf16.msra.mxu0 0
  %1593 = vmatprep.subr.bf16.mxu0 0
  %1594 = vmatpush1.bf16.msra.mxu0 0
  %1595 = vmatprep.subr.bf16.mxu0 0
  %1596 = vmatpush1.bf16.msra.mxu0 0
  %1597 = vmatprep.subr.bf16.mxu0 0
  %1598 = vmatpush1.bf16.msra.mxu0 0
  %1599 = vmatprep.subr.bf16.mxu0 0
  %1600 = vmatpush1.bf16.msra.mxu0 0
  %1601 = vmatprep.subr.bf16.mxu0 0
  %1602 = vmatpush1.bf16.msra.mxu0 0
  %1603 = vmatprep.subr.bf16.mxu0 0
  %1604 = vmatpush1.bf16.msra.mxu0 0
  %1605 = vmatprep.mubr.bf16.mxu0 0
  %1606 = vmatmul.mubr.bf16.gmra.mrb[0].mxu0 %v1439
  %v1607 = vpop.f32.mrb[0].mxu0
  %v1608 = vadd.f32 0.0, %v1607
  %v1609 = vpop.f32.mrb[0].mxu0
  %v1610 = vpop.f32.mrb[0].mxu0
  %v1611 = vpop.f32.mrb[0].mxu0
  %1612 = vdwg.mxu0
  %v1613 = vadd.f32 %v1572, %v1608
  %v1614 = vmax.f32 %v1613, 0.0
  %v1615 = vpack.c.bf16 %v1614, %v1614
  %v1618 = vunpack.c.l.s4 1966171168
  %v1619 = vunpack.c.0.s8 %v1618
  %v1620 = vlaneseq
  %v1621 = vshrl.u32 %v1620, 7
  %v1622 = vsub.s32 %v1619, %v1621
  %v1623 = vrot.slane %v1615, %v1622
  %v1624 = vcombine.high %v1623, %v1623
  %v1626 = vunpack.c.l.s4 1966171168
  %v1627 = vunpack.c.0.s8 %v1626
  %v1628 = vlaneseq
  %v1629 = vshrl.u32 %v1628, 7
  %v1630 = vsub.s32 %v1627, %v1629
  %v1631 = vrot.slane %v1623, %v1630
  %v1633 = vunpack.c.l.s4 1966171168
  %v1634 = vunpack.c.0.s8 %v1633
  %v1635 = vlaneseq
  %v1636 = vshrl.u32 %v1635, 7
  %v1637 = vsub.s32 %v1634, %v1636
  %v1638 = vrot.slane %v1624, %v1637
  %v1639 = vcombine.high %v1631, %v1631
  %v1640 = vcombine.high %v1638, %v1638
  %v1641 = vunpack.i.l.s16 %v1631
  %v1642 = vunpack.i.h.s16 %v1631
  %v1643 = vunpack.i.l.s16 %v1638
  %v1644 = vunpack.i.h.s16 %v1638
  %v1645 = vunpack.i.l.s16 %v1639
  %v1646 = vunpack.i.h.s16 %v1639
  %v1647 = vunpack.i.l.s16 %v1640
  %v1648 = vunpack.i.h.s16 %v1640
  %v1649 = vpack.i.b16 %v1641, %v1641
  %v1650 = vpack.i.b16 %v1642, %v1642
  %v1651 = vpack.i.b16 %v1643, %v1643
  %v1652 = vpack.i.b16 %v1644, %v1644
  %v1653 = vpack.i.b16 %v1645, %v1645
  %v1654 = vpack.i.b16 %v1646, %v1646
  %v1655 = vpack.i.b16 %v1647, %v1647
  %v1656 = vpack.i.b16 %v1648, %v1648
  %v1658 = vunpack.c.l.s4 286326784
  %v1659 = vunpack.c.0.s8 %v1658
  %v1660 = vlaneseq
  %v1661 = vshrl.u32 %v1660, 7
  %v1662 = vsub.s32 %v1659, %v1661
  %v1663 = vrot.slane %v1649, %v1662
  %v1665 = vunpack.c.l.s4 286326784
  %v1666 = vunpack.c.0.s8 %v1665
  %v1667 = vlaneseq
  %v1668 = vshrl.u32 %v1667, 7
  %v1669 = vsub.s32 %v1666, %v1668
  %v1670 = vrot.slane %v1650, %v1669
  %v1672 = vunpack.c.l.s4 286326784
  %v1673 = vunpack.c.0.s8 %v1672
  %v1674 = vlaneseq
  %v1675 = vshrl.u32 %v1674, 7
  %v1676 = vsub.s32 %v1673, %v1675
  %v1677 = vrot.slane %v1651, %v1676
  %v1679 = vunpack.c.l.s4 286326784
  %v1680 = vunpack.c.0.s8 %v1679
  %v1681 = vlaneseq
  %v1682 = vshrl.u32 %v1681, 7
  %v1683 = vsub.s32 %v1680, %v1682
  %v1684 = vrot.slane %v1652, %v1683
  %v1686 = vunpack.c.l.s4 286326784
  %v1687 = vunpack.c.0.s8 %v1686
  %v1688 = vlaneseq
  %v1689 = vshrl.u32 %v1688, 7
  %v1690 = vsub.s32 %v1687, %v1689
  %v1691 = vrot.slane %v1653, %v1690
  %v1693 = vunpack.c.l.s4 286326784
  %v1694 = vunpack.c.0.s8 %v1693
  %v1695 = vlaneseq
  %v1696 = vshrl.u32 %v1695, 7
  %v1697 = vsub.s32 %v1694, %v1696
  %v1698 = vrot.slane %v1654, %v1697
  %v1700 = vunpack.c.l.s4 286326784
  %v1701 = vunpack.c.0.s8 %v1700
  %v1702 = vlaneseq
  %v1703 = vshrl.u32 %v1702, 7
  %v1704 = vsub.s32 %v1701, %v1703
  %v1705 = vrot.slane %v1655, %v1704
  %v1707 = vunpack.c.l.s4 286326784
  %v1708 = vunpack.c.0.s8 %v1707
  %v1709 = vlaneseq
  %v1710 = vshrl.u32 %v1709, 7
  %v1711 = vsub.s32 %v1708, %v1710
  %v1712 = vrot.slane %v1656, %v1711
  %vm1721 = vcmask 1042434
  %vm1722 = vsmask.f32 2304
  %vm1723 = vmand %vm1721, %vm1722
  %v1724 = vld [vmem:[%s7] sm:$0x4]
  %v1725 = vsel %vm1723, %v1663, %v1724
  %1726 = vst [vmem:[%s7] sm:$0x4] %v1725
  %v1727 = vld [vmem:[%s7 + $0x4] sm:$0x4]
  %v1728 = vsel %vm1723, %v1670, %v1727
  %1729 = vst [vmem:[%s7 + $0x4] sm:$0x4] %v1728
  %v1730 = vld [vmem:[%s7 + $0x8] sm:$0x4]
  %v1731 = vsel %vm1723, %v1677, %v1730
  %1732 = vst [vmem:[%s7 + $0x8] sm:$0x4] %v1731
  %v1733 = vld [vmem:[%s7 + $0xc] sm:$0x4]
  %v1734 = vsel %vm1723, %v1684, %v1733
  %1735 = vst [vmem:[%s7 + $0xc] sm:$0x4] %v1734
  %v1736 = vld [vmem:[%s7 + $0x10] sm:$0x4]
  %v1737 = vsel %vm1723, %v1691, %v1736
  %1738 = vst [vmem:[%s7 + $0x10] sm:$0x4] %v1737
  %v1739 = vld [vmem:[%s7 + $0x14] sm:$0x4]
  %v1740 = vsel %vm1723, %v1698, %v1739
  %1741 = vst [vmem:[%s7 + $0x14] sm:$0x4] %v1740
  %v1742 = vld [vmem:[%s7 + $0x18] sm:$0x4]
  %v1743 = vsel %vm1723, %v1705, %v1742
  %1744 = vst [vmem:[%s7 + $0x18] sm:$0x4] %v1743
  %v1745 = vld [vmem:[%s7 + $0x1c] sm:$0x4]
  %v1746 = vsel %vm1723, %v1712, %v1745
  %1747 = vst [vmem:[%s7 + $0x1c] sm:$0x4] %v1746
  %v1748 = vld [vmem:[#allocation4 + $0x28] sm:$0xff]
  %v1749 = vadd.f32 %v1748, %v815
  %1750 = vmatprep.subr.bf16.mxu0 0
  %1751 = vmatpush1.bf16.msra.mxu0 %v851
  %1752 = vmatprep.subr.bf16.mxu0 0
  %1753 = vmatpush1.bf16.msra.mxu0 %v852
  %1754 = vmatprep.subr.bf16.mxu0 0
  %1755 = vmatpush1.bf16.msra.mxu0 %v853
  %1756 = vmatprep.subr.bf16.mxu0 0
  %1757 = vmatpush1.bf16.msra.mxu0 %v854
  %1758 = vmatprep.subr.bf16.mxu0 0
  %1759 = vmatpush1.bf16.msra.mxu0 %v855
  %1760 = vmatprep.subr.bf16.mxu0 0
  %1761 = vmatpush1.bf16.msra.mxu0 %v856
  %1762 = vmatprep.subr.bf16.mxu0 0
  %1763 = vmatpush1.bf16.msra.mxu0 %v857
  %1764 = vmatprep.subr.bf16.mxu0 0
  %1765 = vmatpush1.bf16.msra.mxu0 %v858
  %1766 = vmatprep.subr.bf16.mxu0 0
  %1767 = vmatpush1.bf16.msra.mxu0 0
  %1768 = vmatprep.subr.bf16.mxu0 0
  %1769 = vmatpush1.bf16.msra.mxu0 0
  %1770 = vmatprep.subr.bf16.mxu0 0
  %1771 = vmatpush1.bf16.msra.mxu0 0
  %1772 = vmatprep.subr.bf16.mxu0 0
  %1773 = vmatpush1.bf16.msra.mxu0 0
  %1774 = vmatprep.subr.bf16.mxu0 0
  %1775 = vmatpush1.bf16.msra.mxu0 0
  %1776 = vmatprep.subr.bf16.mxu0 0
  %1777 = vmatpush1.bf16.msra.mxu0 0
  %1778 = vmatprep.subr.bf16.mxu0 0
  %1779 = vmatpush1.bf16.msra.mxu0 0
  %1780 = vmatprep.subr.bf16.mxu0 0
  %1781 = vmatpush1.bf16.msra.mxu0 0
  %1782 = vmatprep.mubr.bf16.mxu0 0
  %1783 = vmatmul.mubr.bf16.gmra.mrb[0].mxu0 %v1615
  %v1784 = vpop.f32.mrb[0].mxu0
  %v1785 = vadd.f32 0.0, %v1784
  %v1786 = vpop.f32.mrb[0].mxu0
  %v1787 = vpop.f32.mrb[0].mxu0
  %v1788 = vpop.f32.mrb[0].mxu0
  %1789 = vdwg.mxu0
  %v1790 = vadd.f32 %v1749, %v1785
  %v1791 = vmax.f32 %v1790, 0.0
  %v1792 = vpack.c.bf16 %v1791, %v1791
  %v1795 = vunpack.c.l.s4 1966171168
  %v1796 = vunpack.c.0.s8 %v1795
  %v1797 = vlaneseq
  %v1798 = vshrl.u32 %v1797, 7
  %v1799 = vsub.s32 %v1796, %v1798
  %v1800 = vrot.slane %v1792, %v1799
  %v1801 = vcombine.high %v1800, %v1800
  %v1803 = vunpack.c.l.s4 1966171168
  %v1804 = vunpack.c.0.s8 %v1803
  %v1805 = vlaneseq
  %v1806 = vshrl.u32 %v1805, 7
  %v1807 = vsub.s32 %v1804, %v1806
  %v1808 = vrot.slane %v1800, %v1807
  %v1810 = vunpack.c.l.s4 1966171168
  %v1811 = vunpack.c.0.s8 %v1810
  %v1812 = vlaneseq
  %v1813 = vshrl.u32 %v1812, 7
  %v1814 = vsub.s32 %v1811, %v1813
  %v1815 = vrot.slane %v1801, %v1814
  %v1816 = vcombine.high %v1808, %v1808
  %v1817 = vcombine.high %v1815, %v1815
  %v1818 = vunpack.i.l.s16 %v1808
  %v1819 = vunpack.i.h.s16 %v1808
  %v1820 = vunpack.i.l.s16 %v1815
  %v1821 = vunpack.i.h.s16 %v1815
  %v1822 = vunpack.i.l.s16 %v1816
  %v1823 = vunpack.i.h.s16 %v1816
  %v1824 = vunpack.i.l.s16 %v1817
  %v1825 = vunpack.i.h.s16 %v1817
  %v1826 = vpack.i.b16 %v1818, %v1818
  %v1827 = vpack.i.b16 %v1819, %v1819
  %v1828 = vpack.i.b16 %v1820, %v1820
  %v1829 = vpack.i.b16 %v1821, %v1821
  %v1830 = vpack.i.b16 %v1822, %v1822
  %v1831 = vpack.i.b16 %v1823, %v1823
  %v1832 = vpack.i.b16 %v1824, %v1824
  %v1833 = vpack.i.b16 %v1825, %v1825
  %v1835 = vunpack.c.l.s4 286326784
  %v1836 = vunpack.c.0.s8 %v1835
  %v1837 = vlaneseq
  %v1838 = vshrl.u32 %v1837, 7
  %v1839 = vsub.s32 %v1836, %v1838
  %v1840 = vrot.slane %v1826, %v1839
  %v1842 = vunpack.c.l.s4 286326784
  %v1843 = vunpack.c.0.s8 %v1842
  %v1844 = vlaneseq
  %v1845 = vshrl.u32 %v1844, 7
  %v1846 = vsub.s32 %v1843, %v1845
  %v1847 = vrot.slane %v1827, %v1846
  %v1849 = vunpack.c.l.s4 286326784
  %v1850 = vunpack.c.0.s8 %v1849
  %v1851 = vlaneseq
  %v1852 = vshrl.u32 %v1851, 7
  %v1853 = vsub.s32 %v1850, %v1852
  %v1854 = vrot.slane %v1828, %v1853
  %v1856 = vunpack.c.l.s4 286326784
  %v1857 = vunpack.c.0.s8 %v1856
  %v1858 = vlaneseq
  %v1859 = vshrl.u32 %v1858, 7
  %v1860 = vsub.s32 %v1857, %v1859
  %v1861 = vrot.slane %v1829, %v1860
  %v1863 = vunpack.c.l.s4 286326784
  %v1864 = vunpack.c.0.s8 %v1863
  %v1865 = vlaneseq
  %v1866 = vshrl.u32 %v1865, 7
  %v1867 = vsub.s32 %v1864, %v1866
  %v1868 = vrot.slane %v1830, %v1867
  %v1870 = vunpack.c.l.s4 286326784
  %v1871 = vunpack.c.0.s8 %v1870
  %v1872 = vlaneseq
  %v1873 = vshrl.u32 %v1872, 7
  %v1874 = vsub.s32 %v1871, %v1873
  %v1875 = vrot.slane %v1831, %v1874
  %v1877 = vunpack.c.l.s4 286326784
  %v1878 = vunpack.c.0.s8 %v1877
  %v1879 = vlaneseq
  %v1880 = vshrl.u32 %v1879, 7
  %v1881 = vsub.s32 %v1878, %v1880
  %v1882 = vrot.slane %v1832, %v1881
  %v1884 = vunpack.c.l.s4 286326784
  %v1885 = vunpack.c.0.s8 %v1884
  %v1886 = vlaneseq
  %v1887 = vshrl.u32 %v1886, 7
  %v1888 = vsub.s32 %v1885, %v1887
  %v1889 = vrot.slane %v1833, %v1888
  %vm1898 = vsmask.f32 7946
  %vm1899 = vmand %vm1721, %vm1898
  %v1900 = vld [vmem:[%s7] sm:$0x4]
  %v1901 = vsel %vm1899, %v1840, %v1900
  %1902 = vst [vmem:[%s7] sm:$0x4] %v1901
  %v1903 = vld [vmem:[%s7 + $0x4] sm:$0x4]
  %v1904 = vsel %vm1899, %v1847, %v1903
  %1905 = vst [vmem:[%s7 + $0x4] sm:$0x4] %v1904
  %v1906 = vld [vmem:[%s7 + $0x8] sm:$0x4]
  %v1907 = vsel %vm1899, %v1854, %v1906
  %1908 = vst [vmem:[%s7 + $0x8] sm:$0x4] %v1907
  %v1909 = vld [vmem:[%s7 + $0xc] sm:$0x4]
  %v1910 = vsel %vm1899, %v1861, %v1909
  %1911 = vst [vmem:[%s7 + $0xc] sm:$0x4] %v1910
  %v1912 = vld [vmem:[%s7 + $0x10] sm:$0x4]
  %v1913 = vsel %vm1899, %v1868, %v1912
  %1914 = vst [vmem:[%s7 + $0x10] sm:$0x4] %v1913
  %v1915 = vld [vmem:[%s7 + $0x14] sm:$0x4]
  %v1916 = vsel %vm1899, %v1875, %v1915
  %1917 = vst [vmem:[%s7 + $0x14] sm:$0x4] %v1916
  %v1918 = vld [vmem:[%s7 + $0x18] sm:$0x4]
  %v1919 = vsel %vm1899, %v1882, %v1918
  %1920 = vst [vmem:[%s7 + $0x18] sm:$0x4] %v1919
  %v1921 = vld [vmem:[%s7 + $0x1c] sm:$0x4]
  %v1922 = vsel %vm1899, %v1889, %v1921
  %1923 = vst [vmem:[%s7 + $0x1c] sm:$0x4] %v1922
  %v1924 = vld [vmem:[#allocation4 + $0x30] sm:$0xff]
  %v1925 = vadd.f32 %v1924, %v815
  %1926 = vmatprep.subr.bf16.mxu0 0
  %1927 = vmatpush1.bf16.msra.mxu0 %v851
  %1928 = vmatprep.subr.bf16.mxu0 0
  %1929 = vmatpush1.bf16.msra.mxu0 %v852
  %1930 = vmatprep.subr.bf16.mxu0 0
  %1931 = vmatpush1.bf16.msra.mxu0 %v853
  %1932 = vmatprep.subr.bf16.mxu0 0
  %1933 = vmatpush1.bf16.msra.mxu0 %v854
  %1934 = vmatprep.subr.bf16.mxu0 0
  %1935 = vmatpush1.bf16.msra.mxu0 %v855
  %1936 = vmatprep.subr.bf16.mxu0 0
  %1937 = vmatpush1.bf16.msra.mxu0 %v856
  %1938 = vmatprep.subr.bf16.mxu0 0
  %1939 = vmatpush1.bf16.msra.mxu0 %v857
  %1940 = vmatprep.subr.bf16.mxu0 0
  %1941 = vmatpush1.bf16.msra.mxu0 %v858
  %1942 = vmatprep.subr.bf16.mxu0 0
  %1943 = vmatpush1.bf16.msra.mxu0 0
  %1944 = vmatprep.subr.bf16.mxu0 0
  %1945 = vmatpush1.bf16.msra.mxu0 0
  %1946 = vmatprep.subr.bf16.mxu0 0
  %1947 = vmatpush1.bf16.msra.mxu0 0
  %1948 = vmatprep.subr.bf16.mxu0 0
  %1949 = vmatpush1.bf16.msra.mxu0 0
  %1950 = vmatprep.subr.bf16.mxu0 0
  %1951 = vmatpush1.bf16.msra.mxu0 0
  %1952 = vmatprep.subr.bf16.mxu0 0
  %1953 = vmatpush1.bf16.msra.mxu0 0
  %1954 = vmatprep.subr.bf16.mxu0 0
  %1955 = vmatpush1.bf16.msra.mxu0 0
  %1956 = vmatprep.subr.bf16.mxu0 0
  %1957 = vmatpush1.bf16.msra.mxu0 0
  %1958 = vmatprep.mubr.bf16.mxu0 0
  %1959 = vmatmul.mubr.bf16.gmra.mrb[0].mxu0 %v1792
  %v1960 = vpop.f32.mrb[0].mxu0
  %v1961 = vadd.f32 0.0, %v1960
  %v1962 = vpop.f32.mrb[0].mxu0
  %v1963 = vpop.f32.mrb[0].mxu0
  %v1964 = vpop.f32.mrb[0].mxu0
  %1965 = vdwg.mxu0
  %v1966 = vadd.f32 %v1925, %v1961
  %v1967 = vmax.f32 %v1966, 0.0
  %v1968 = vpack.c.bf16 %v1967, %v1967
  %v1971 = vunpack.c.l.s4 1966171168
  %v1972 = vunpack.c.0.s8 %v1971
  %v1973 = vlaneseq
  %v1974 = vshrl.u32 %v1973, 7
  %v1975 = vsub.s32 %v1972, %v1974
  %v1976 = vrot.slane %v1968, %v1975
  %v1977 = vcombine.high %v1976, %v1976
  %v1979 = vunpack.c.l.s4 1966171168
  %v1980 = vunpack.c.0.s8 %v1979
  %v1981 = vlaneseq
  %v1982 = vshrl.u32 %v1981, 7
  %v1983 = vsub.s32 %v1980, %v1982
  %v1984 = vrot.slane %v1976, %v1983
  %v1986 = vunpack.c.l.s4 1966171168
  %v1987 = vunpack.c.0.s8 %v1986
  %v1988 = vlaneseq
  %v1989 = vshrl.u32 %v1988, 7
  %v1990 = vsub.s32 %v1987, %v1989
  %v1991 = vrot.slane %v1977, %v1990
  %v1992 = vcombine.high %v1984, %v1984
  %v1993 = vcombine.high %v1991, %v1991
  %v1994 = vunpack.i.l.s16 %v1984
  %v1995 = vunpack.i.h.s16 %v1984
  %v1996 = vunpack.i.l.s16 %v1991
  %v1997 = vunpack.i.h.s16 %v1991
  %v1998 = vunpack.i.l.s16 %v1992
  %v1999 = vunpack.i.h.s16 %v1992
  %v2000 = vunpack.i.l.s16 %v1993
  %v2001 = vunpack.i.h.s16 %v1993
  %v2002 = vpack.i.b16 %v1994, %v1994
  %v2003 = vpack.i.b16 %v1995, %v1995
  %v2004 = vpack.i.b16 %v1996, %v1996
  %v2005 = vpack.i.b16 %v1997, %v1997
  %v2006 = vpack.i.b16 %v1998, %v1998
  %v2007 = vpack.i.b16 %v1999, %v1999
  %v2008 = vpack.i.b16 %v2000, %v2000
  %v2009 = vpack.i.b16 %v2001, %v2001
  %v2011 = vunpack.c.l.s4 286326784
  %v2012 = vunpack.c.0.s8 %v2011
  %v2013 = vlaneseq
  %v2014 = vshrl.u32 %v2013, 7
  %v2015 = vsub.s32 %v2012, %v2014
  %v2016 = vrot.slane %v2002, %v2015
  %v2018 = vunpack.c.l.s4 286326784
  %v2019 = vunpack.c.0.s8 %v2018
  %v2020 = vlaneseq
  %v2021 = vshrl.u32 %v2020, 7
  %v2022 = vsub.s32 %v2019, %v2021
  %v2023 = vrot.slane %v2003, %v2022
  %v2025 = vunpack.c.l.s4 286326784
  %v2026 = vunpack.c.0.s8 %v2025
  %v2027 = vlaneseq
  %v2028 = vshrl.u32 %v2027, 7
  %v2029 = vsub.s32 %v2026, %v2028
  %v2030 = vrot.slane %v2004, %v2029
  %v2032 = vunpack.c.l.s4 286326784
  %v2033 = vunpack.c.0.s8 %v2032
  %v2034 = vlaneseq
  %v2035 = vshrl.u32 %v2034, 7
  %v2036 = vsub.s32 %v2033, %v2035
  %v2037 = vrot.slane %v2005, %v2036
  %v2039 = vunpack.c.l.s4 286326784
  %v2040 = vunpack.c.0.s8 %v2039
  %v2041 = vlaneseq
  %v2042 = vshrl.u32 %v2041, 7
  %v2043 = vsub.s32 %v2040, %v2042
  %v2044 = vrot.slane %v2006, %v2043
  %v2046 = vunpack.c.l.s4 286326784
  %v2047 = vunpack.c.0.s8 %v2046
  %v2048 = vlaneseq
  %v2049 = vshrl.u32 %v2048, 7
  %v2050 = vsub.s32 %v2047, %v2049
  %v2051 = vrot.slane %v2007, %v2050
  %v2053 = vunpack.c.l.s4 286326784
  %v2054 = vunpack.c.0.s8 %v2053
  %v2055 = vlaneseq
  %v2056 = vshrl.u32 %v2055, 7
  %v2057 = vsub.s32 %v2054, %v2056
  %v2058 = vrot.slane %v2008, %v2057
  %v2060 = vunpack.c.l.s4 286326784
  %v2061 = vunpack.c.0.s8 %v2060
  %v2062 = vlaneseq
  %v2063 = vshrl.u32 %v2062, 7
  %v2064 = vsub.s32 %v2061, %v2063
  %v2065 = vrot.slane %v2009, %v2064
  %vm2074 = vcmask 1043459
  %vm2075 = vsmask.f32 3328
  %vm2076 = vmand %vm2074, %vm2075
  %v2077 = vld [vmem:[%s7] sm:$0x8]
  %v2078 = vsel %vm2076, %v2016, %v2077
  %2079 = vst [vmem:[%s7] sm:$0x8] %v2078
  %v2080 = vld [vmem:[%s7 + $0x4] sm:$0x8]
  %v2081 = vsel %vm2076, %v2023, %v2080
  %2082 = vst [vmem:[%s7 + $0x4] sm:$0x8] %v2081
  %v2083 = vld [vmem:[%s7 + $0x8] sm:$0x8]
  %v2084 = vsel %vm2076, %v2030, %v2083
  %2085 = vst [vmem:[%s7 + $0x8] sm:$0x8] %v2084
  %v2086 = vld [vmem:[%s7 + $0xc] sm:$0x8]
  %v2087 = vsel %vm2076, %v2037, %v2086
  %2088 = vst [vmem:[%s7 + $0xc] sm:$0x8] %v2087
  %v2089 = vld [vmem:[%s7 + $0x10] sm:$0x8]
  %v2090 = vsel %vm2076, %v2044, %v2089
  %2091 = vst [vmem:[%s7 + $0x10] sm:$0x8] %v2090
  %v2092 = vld [vmem:[%s7 + $0x14] sm:$0x8]
  %v2093 = vsel %vm2076, %v2051, %v2092
  %2094 = vst [vmem:[%s7 + $0x14] sm:$0x8] %v2093
  %v2095 = vld [vmem:[%s7 + $0x18] sm:$0x8]
  %v2096 = vsel %vm2076, %v2058, %v2095
  %2097 = vst [vmem:[%s7 + $0x18] sm:$0x8] %v2096
  %v2098 = vld [vmem:[%s7 + $0x1c] sm:$0x8]
  %v2099 = vsel %vm2076, %v2065, %v2098
  %2100 = vst [vmem:[%s7 + $0x1c] sm:$0x8] %v2099
  %v2101 = vld [vmem:[#allocation4 + $0x38] sm:$0xff]
  %v2102 = vadd.f32 %v2101, %v815
  %2103 = vmatprep.subr.bf16.mxu0 0
  %2104 = vmatpush1.bf16.msra.mxu0 %v851
  %2105 = vmatprep.subr.bf16.mxu0 0
  %2106 = vmatpush1.bf16.msra.mxu0 %v852
  %2107 = vmatprep.subr.bf16.mxu0 0
  %2108 = vmatpush1.bf16.msra.mxu0 %v853
  %2109 = vmatprep.subr.bf16.mxu0 0
  %2110 = vmatpush1.bf16.msra.mxu0 %v854
  %2111 = vmatprep.subr.bf16.mxu0 0
  %2112 = vmatpush1.bf16.msra.mxu0 %v855
  %2113 = vmatprep.subr.bf16.mxu0 0
  %2114 = vmatpush1.bf16.msra.mxu0 %v856
  %2115 = vmatprep.subr.bf16.mxu0 0
  %2116 = vmatpush1.bf16.msra.mxu0 %v857
  %2117 = vmatprep.subr.bf16.mxu0 0
  %2118 = vmatpush1.bf16.msra.mxu0 %v858
  %2119 = vmatprep.subr.bf16.mxu0 0
  %2120 = vmatpush1.bf16.msra.mxu0 0
  %2121 = vmatprep.subr.bf16.mxu0 0
  %2122 = vmatpush1.bf16.msra.mxu0 0
  %2123 = vmatprep.subr.bf16.mxu0 0
  %2124 = vmatpush1.bf16.msra.mxu0 0
  %2125 = vmatprep.subr.bf16.mxu0 0
  %2126 = vmatpush1.bf16.msra.mxu0 0
  %2127 = vmatprep.subr.bf16.mxu0 0
  %2128 = vmatpush1.bf16.msra.mxu0 0
  %2129 = vmatprep.subr.bf16.mxu0 0
  %2130 = vmatpush1.bf16.msra.mxu0 0
  %2131 = vmatprep.subr.bf16.mxu0 0
  %2132 = vmatpush1.bf16.msra.mxu0 0
  %2133 = vmatprep.subr.bf16.mxu0 0
  %2134 = vmatpush1.bf16.msra.mxu0 0
  %2135 = vmatprep.mubr.bf16.mxu0 0
  %2136 = vmatmul.mubr.bf16.gmra.mrb[0].mxu0 %v1968
  %v2137 = vpop.f32.mrb[0].mxu0
  %v2138 = vadd.f32 0.0, %v2137
  %v2139 = vpop.f32.mrb[0].mxu0
  %v2140 = vpop.f32.mrb[0].mxu0
  %v2141 = vpop.f32.mrb[0].mxu0
  %2142 = vdwg.mxu0
  %v2143 = vadd.f32 %v2102, %v2138
  %v2144 = vmax.f32 %v2143, 0.0
  %v2145 = vpack.c.bf16 %v2144, %v2144
  %v2148 = vunpack.c.l.s4 1966171168
  %v2149 = vunpack.c.0.s8 %v2148
  %v2150 = vlaneseq
  %v2151 = vshrl.u32 %v2150, 7
  %v2152 = vsub.s32 %v2149, %v2151
  %v2153 = vrot.slane %v2145, %v2152
  %v2154 = vcombine.high %v2153, %v2153
  %v2156 = vunpack.c.l.s4 1966171168
  %v2157 = vunpack.c.0.s8 %v2156
  %v2158 = vlaneseq
  %v2159 = vshrl.u32 %v2158, 7
  %v2160 = vsub.s32 %v2157, %v2159
  %v2161 = vrot.slane %v2153, %v2160
  %v2163 = vunpack.c.l.s4 1966171168
  %v2164 = vunpack.c.0.s8 %v2163
  %v2165 = vlaneseq
  %v2166 = vshrl.u32 %v2165, 7
  %v2167 = vsub.s32 %v2164, %v2166
  %v2168 = vrot.slane %v2154, %v2167
  %v2169 = vcombine.high %v2161, %v2161
  %v2170 = vcombine.high %v2168, %v2168
  %v2171 = vunpack.i.l.s16 %v2161
  %v2172 = vunpack.i.h.s16 %v2161
  %v2173 = vunpack.i.l.s16 %v2168
  %v2174 = vunpack.i.h.s16 %v2168
  %v2175 = vunpack.i.l.s16 %v2169
  %v2176 = vunpack.i.h.s16 %v2169
  %v2177 = vunpack.i.l.s16 %v2170
  %v2178 = vunpack.i.h.s16 %v2170
  %v2179 = vpack.i.b16 %v2171, %v2171
  %v2180 = vpack.i.b16 %v2172, %v2172
  %v2181 = vpack.i.b16 %v2173, %v2173
  %v2182 = vpack.i.b16 %v2174, %v2174
  %v2183 = vpack.i.b16 %v2175, %v2175
  %v2184 = vpack.i.b16 %v2176, %v2176
  %v2185 = vpack.i.b16 %v2177, %v2177
  %v2186 = vpack.i.b16 %v2178, %v2178
  %v2188 = vunpack.c.l.s4 286326784
  %v2189 = vunpack.c.0.s8 %v2188
  %v2190 = vlaneseq
  %v2191 = vshrl.u32 %v2190, 7
  %v2192 = vsub.s32 %v2189, %v2191
  %v2193 = vrot.slane %v2179, %v2192
  %v2195 = vunpack.c.l.s4 286326784
  %v2196 = vunpack.c.0.s8 %v2195
  %v2197 = vlaneseq
  %v2198 = vshrl.u32 %v2197, 7
  %v2199 = vsub.s32 %v2196, %v2198
  %v2200 = vrot.slane %v2180, %v2199
  %v2202 = vunpack.c.l.s4 286326784
  %v2203 = vunpack.c.0.s8 %v2202
  %v2204 = vlaneseq
  %v2205 = vshrl.u32 %v2204, 7
  %v2206 = vsub.s32 %v2203, %v2205
  %v2207 = vrot.slane %v2181, %v2206
  %v2209 = vunpack.c.l.s4 286326784
  %v2210 = vunpack.c.0.s8 %v2209
  %v2211 = vlaneseq
  %v2212 = vshrl.u32 %v2211, 7
  %v2213 = vsub.s32 %v2210, %v2212
  %v2214 = vrot.slane %v2182, %v2213
  %v2216 = vunpack.c.l.s4 286326784
  %v2217 = vunpack.c.0.s8 %v2216
  %v2218 = vlaneseq
  %v2219 = vshrl.u32 %v2218, 7
  %v2220 = vsub.s32 %v2217, %v2219
  %v2221 = vrot.slane %v2183, %v2220
  %v2223 = vunpack.c.l.s4 286326784
  %v2224 = vunpack.c.0.s8 %v2223
  %v2225 = vlaneseq
  %v2226 = vshrl.u32 %v2225, 7
  %v2227 = vsub.s32 %v2224, %v2226
  %v2228 = vrot.slane %v2184, %v2227
  %v2230 = vunpack.c.l.s4 286326784
  %v2231 = vunpack.c.0.s8 %v2230
  %v2232 = vlaneseq
  %v2233 = vshrl.u32 %v2232, 7
  %v2234 = vsub.s32 %v2231, %v2233
  %v2235 = vrot.slane %v2185, %v2234
  %v2237 = vunpack.c.l.s4 286326784
  %v2238 = vunpack.c.0.s8 %v2237
  %v2239 = vlaneseq
  %v2240 = vshrl.u32 %v2239, 7
  %v2241 = vsub.s32 %v2238, %v2240
  %v2242 = vrot.slane %v2186, %v2241
  %vm2251 = vsmask.f32 7950
  %vm2252 = vmand %vm2074, %vm2251
  %v2253 = vld [vmem:[%s7] sm:$0x8]
  %v2254 = vsel %vm2252, %v2193, %v2253
  %2255 = vst [vmem:[%s7] sm:$0x8] %v2254
  %v2256 = vld [vmem:[%s7 + $0x4] sm:$0x8]
  %v2257 = vsel %vm2252, %v2200, %v2256
  %2258 = vst [vmem:[%s7 + $0x4] sm:$0x8] %v2257
  %v2259 = vld [vmem:[%s7 + $0x8] sm:$0x8]
  %v2260 = vsel %vm2252, %v2207, %v2259
  %2261 = vst [vmem:[%s7 + $0x8] sm:$0x8] %v2260
  %v2262 = vld [vmem:[%s7 + $0xc] sm:$0x8]
  %v2263 = vsel %vm2252, %v2214, %v2262
  %2264 = vst [vmem:[%s7 + $0xc] sm:$0x8] %v2263
  %v2265 = vld [vmem:[%s7 + $0x10] sm:$0x8]
  %v2266 = vsel %vm2252, %v2221, %v2265
  %2267 = vst [vmem:[%s7 + $0x10] sm:$0x8] %v2266
  %v2268 = vld [vmem:[%s7 + $0x14] sm:$0x8]
  %v2269 = vsel %vm2252, %v2228, %v2268
  %2270 = vst [vmem:[%s7 + $0x14] sm:$0x8] %v2269
  %v2271 = vld [vmem:[%s7 + $0x18] sm:$0x8]
  %v2272 = vsel %vm2252, %v2235, %v2271
  %2273 = vst [vmem:[%s7 + $0x18] sm:$0x8] %v2272
  %v2274 = vld [vmem:[%s7 + $0x1c] sm:$0x8]
  %v2275 = vsel %vm2252, %v2242, %v2274
  %2276 = vst [vmem:[%s7 + $0x1c] sm:$0x8] %v2275
  %2277 = vst [vmem:[#allocation3] sm:$0xff] %v2144
  // Predicated region
  $region34: #{rnn_language_model_forward.2} parent=0 // pred_check
    _
  $region35: #{rnn_language_model_forward.2} parent=0 // pred_check_branch
    %2279 = sbr.rel (0) target = $region37
  $region36: #{rnn_language_model_forward.2} parent=0 // pred_region
    _
  $region37: #{rnn_language_model_forward.2} parent=0 // pred_fallthru
    _
  // Predicated region
  $region38: #{rnn_language_model_forward.2} parent=0 // pred_check
    _
  $region39: #{rnn_language_model_forward.2} parent=0 // pred_check_branch
    %2281 = sbr.rel (0) target = $region41
  $region40: #{rnn_language_model_forward.2} parent=0 // pred_region
    _
  $region41: #{rnn_language_model_forward.2} parent=0 // pred_fallthru
    _

</llo_original>
